<compile_context>
chip_gen: v6e
topology: v6e:2x2x1
jax: 0.10.0
libtpu: 0.0.40
codegen_flags: <defaults>
</compile_context>

<pallas_src>
import math
import functools

import jax
import jax.numpy as jnp
from jax.experimental import pallas as pl
from jax.experimental.pallas import tpu as pltpu


def _round_up(x, m):
    return (x + m - 1) // m * m


def _erf(x):
    # Abramowitz & Stegun 7.1.26 (max abs error ~1.5e-7); uses only exp/abs/
    # where/divide so it always lowers in Mosaic.  Gives exact-erf GELU
    # semantics to f32-level accuracy.
    p = 0.3275911
    a1, a2, a3, a4, a5 = (0.254829592, -0.284496736, 1.421413741,
                          -1.453152027, 1.061405429)
    ax = jnp.abs(x)
    t = 1.0 / (1.0 + p * ax)
    poly = ((((a5 * t + a4) * t + a3) * t + a2) * t + a1) * t
    y = 1.0 - poly * jnp.exp(-ax * ax)
    return jnp.where(x >= 0.0, y, -y)


# ------------------------------ fused ViT kernel ------------------------------

def _vit_kernel(S, Npad, P, D, F, H, C, eps,
                patches_ref, pe_w_ref, prol_ref,
                wa_ref, wb_ref, pv_ref,
                hw1_ref, hw2_ref, hb_ref,
                out_ref, act_ref):
    """One grid step == one encoder layer (grid=(depth,)).

    Token layout inside each per-image block of Npad rows:
      rows [0, P)        : patch tokens (+ pos[1:])
      row  P             : cls token    (+ pos[0])
      rows (P, Npad)     : zero padding (never mixes with real rows)
    act_ref (VMEM scratch) keeps the (M, D) activations resident across layers.
    """
    f32, bf16 = jnp.float32, jnp.bfloat16
    l = pl.program_id(0)
    dh = D // H
    M = S * Npad

    # ---- prologue: patch embedding + cls/pos; activations built at l == 0 ----
    emb = jnp.dot(patches_ref[...].astype(bf16), pe_w_ref[...],
                  preferred_element_type=f32) + prol_ref[0:1, :]       # (S*P, D)
    pos_patch = prol_ref[8:8 + P, :]                                    # (P, D)
    tail_off = 8 + _round_up(P, 8)
    tail = prol_ref[tail_off:tail_off + (Npad - P), :]                  # (Npad-P, D)

    @pl.when(l == 0)
    def _init():
        for i in range(S):
            act_ref[i * Npad:i * Npad + P, :] = emb[i * P:(i + 1) * P, :] + pos_patch
            act_ref[i * Npad + P:(i + 1) * Npad, :] = tail

    x = act_ref[...]                                                    # (M, D) f32
    xb = x.astype(bf16)

    # ---- per-layer weight slabs (streamed per grid step) ----
    wqkv = wa_ref[:, :3 * D]                                            # (D, 3D) bf16
    w1 = wa_ref[:, 3 * D:]                                              # (D, F)  bf16
    wo = wb_ref[:D, :]                                                  # (D, D)  bf16
    w2 = wb_ref[D:, :]                                                  # (F, D)  bf16

    # block-diagonal head matrices (scale folded into hm), built from iota
    d_idx = jax.lax.broadcasted_iota(jnp.int32, (D, H), 0)
    h_idx = jax.lax.broadcasted_iota(jnp.int32, (D, H), 1)
    hm = jnp.where((d_idx >= h_idx * dh) & (d_idx < (h_idx + 1) * dh),
                   1.0 / math.sqrt(dh), 0.0)                            # (D, H) f32
    h_idx2 = jax.lax.broadcasted_iota(jnp.int32, (H, D), 0)
    d_idx2 = jax.lax.broadcasted_iota(jnp.int32, (H, D), 1)
    hmt = jnp.where((d_idx2 >= h_idx2 * dh) & (d_idx2 < (h_idx2 + 1) * dh),
                    1.0, 0.0)                                           # (H, D) f32

    # ---- fused QKV projection (single matmul), then lane slices ----
    qkv = jnp.dot(xb, wqkv, preferred_element_type=f32) + pv_ref[0:1, :3 * D]
    q = qkv[:, :D]
    k = qkv[:, D:2 * D]
    v = qkv[:, 2 * D:3 * D]

    # ---- attention over the image-batch axis S (batch_first=False quirk) ----
    # batched scores: one (S*S*Npad, D) @ (D, H) dot for all (i, j) pairs
    qk = jnp.concatenate(
        [q[i * Npad:(i + 1) * Npad, :] * k[j * Npad:(j + 1) * Npad, :]
         for i in range(S) for j in range(S)], axis=0)                  # (S*S*Npad, D)
    s_all = jnp.dot(qk, hm, preferred_element_type=f32)                 # (S*S*Npad, H)

    # softmax over j (f32), per query block i
    p_list = []
    for i in range(S):
        si = [s_all[(i * S + j) * Npad:(i * S + j + 1) * Npad, :] for j in range(S)]
        m = si[0]
        for j in range(1, S):
            m = jnp.maximum(m, si[j])
        ei = [jnp.exp(t - m) for t in si]
        den = ei[0]
        for j in range(1, S):
            den = den + ei[j]
        inv = pl.reciprocal(den, approx=True)
        p_list += [e * inv for e in ei]
    p_all = jnp.concatenate(p_list, axis=0)                             # (S*S*Npad, H)

    # batched broadcast of per-head probs back to D lanes, then weighted V sum
    pb = jnp.dot(p_all, hmt, preferred_element_type=f32)                # (S*S*Npad, D)
    attn_blocks = []
    for i in range(S):
        acc = pb[(i * S) * Npad:(i * S + 1) * Npad, :] * v[0:Npad, :]
        for j in range(1, S):
            acc = acc + (pb[(i * S + j) * Npad:(i * S + j + 1) * Npad, :]
                         * v[j * Npad:(j + 1) * Npad, :])
        attn_blocks.append(acc)
    attn = (jnp.concatenate(attn_blocks, axis=0) if S > 1
            else attn_blocks[0])                                        # (M, D)

    attn = jnp.dot(attn.astype(bf16), wo,
                   preferred_element_type=f32) + pv_ref[1:2, :D]

    # ---- residual + LayerNorm1 (post-norm) ----
    h = x + attn
    mu = jnp.mean(h, axis=-1, keepdims=True)
    var = jnp.mean(jnp.square(h - mu), axis=-1, keepdims=True)
    h = (h - mu) * jax.lax.rsqrt(var + eps) * pv_ref[2:3, :D] + pv_ref[3:4, :D]

    # ---- FFN (ReLU) ----
    ff = jnp.dot(h.astype(bf16), w1, preferred_element_type=f32) + pv_ref[4:5, :F]
    ff = jnp.maximum(ff, 0.0)
    ff = jnp.dot(ff.astype(bf16), w2, preferred_element_type=f32) + pv_ref[5:6, :D]

    # ---- residual + LayerNorm2 ----
    y = h + ff
    mu = jnp.mean(y, axis=-1, keepdims=True)
    var = jnp.mean(jnp.square(y - mu), axis=-1, keepdims=True)
    y = (y - mu) * jax.lax.rsqrt(var + eps) * pv_ref[6:7, :D] + pv_ref[7:8, :D]

    act_ref[...] = y

    # ---- classification head; the final writeback keeps the last step's value ----
    # cls-row gather via a tiny selection matmul (avoids unaligned sublane ops)
    r_idx = jax.lax.broadcasted_iota(jnp.int32, (S, M), 0)
    c_idx = jax.lax.broadcasted_iota(jnp.int32, (S, M), 1)
    sel = jnp.where(c_idx == r_idx * Npad + P, 1.0, 0.0)                # (S, M) f32
    cls = jnp.dot(sel, y, preferred_element_type=f32)                   # (S, D)

    hh = jnp.dot(cls.astype(bf16), hw1_ref[...],
                 preferred_element_type=f32) + hb_ref[0:1, :F]
    hh = 0.5 * hh * (1.0 + _erf(hh * (1.0 / math.sqrt(2.0))))           # exact-erf GELU
    logits = jnp.dot(hh.astype(bf16), hw2_ref[...],
                     preferred_element_type=f32) + hb_ref[1:2, :C]
    out_ref[...] = logits.astype(out_ref.dtype)


def vit_pallas(patches, kp, *, S, Npad, P, D, F, H, C, depth, eps=1e-5):
    M = S * Npad
    kernel = functools.partial(_vit_kernel, S, Npad, P, D, F, H, C, eps)
    return pl.pallas_call(
        kernel,
        out_shape=jax.ShapeDtypeStruct((S, C), jnp.float32),
        grid=(depth,),
        in_specs=[
            pl.BlockSpec(patches.shape, lambda l: (0, 0)),
            pl.BlockSpec(kp["pe_w"].shape, lambda l: (0, 0)),
            pl.BlockSpec(kp["prol"].shape, lambda l: (0, 0)),
            pl.BlockSpec((None,) + kp["wa"].shape[1:], lambda l: (l, 0, 0)),
            pl.BlockSpec((None,) + kp["wb"].shape[1:], lambda l: (l, 0, 0)),
            pl.BlockSpec((None,) + kp["pv"].shape[1:], lambda l: (l, 0, 0)),
            pl.BlockSpec(kp["hw1"].shape, lambda l: (0, 0)),
            pl.BlockSpec(kp["hw2"].shape, lambda l: (0, 0)),
            pl.BlockSpec(kp["hb"].shape, lambda l: (0, 0)),
        ],
        out_specs=pl.BlockSpec((S, C), lambda l: (0, 0)),
        scratch_shapes=[pltpu.VMEM((M, D), jnp.float32)],
        compiler_params=pltpu.CompilerParams(
            dimension_semantics=("arbitrary",)),
    )(patches, kp["pe_w"], kp["prol"], kp["wa"], kp["wb"], kp["pv"],
      kp["hw1"], kp["hw2"], kp["hb"])


# --------------------------------- model glue ---------------------------------

def vit_forward(img, kp, *, patch_size, heads):
    B, Cc, Himg, Wimg = img.shape
    p = patch_size
    Hp, Wp = Himg // p, Wimg // p
    P = Hp * Wp
    pd = p * p * Cc

    # reproduces: img.unfold(2,p,p).unfold(3,p,p).reshape(B, -1, p*p*C)
    patches = img.reshape(B, Cc, Hp, p, Wp, p).transpose(0, 1, 2, 4, 3, 5)
    patches = patches.reshape(B * P, pd)

    D = kp["pe_w"].shape[1]
    F = kp["hw1"].shape[1]
    C = kp["hw2"].shape[1]
    depth = kp["wa"].shape[0]
    Npad = _round_up(P + 1, 8)

    return vit_pallas(patches, kp, S=B, Npad=Npad, P=P, D=D, F=F,
                      H=heads, C=C, depth=depth)


def init_params(key, *, image_size, patch_size, channels, dim, depth, heads,
                mlp_dim, num_classes):
    """PyTorch-layout parameters (W: (out, in)), f32."""
    num_patches = (image_size // patch_size) ** 2
    patch_dim = channels * patch_size ** 2
    keys = iter(jax.random.split(key, 8 + 8 * depth))

    def nrm(shape, scale=0.02):
        return (scale * jax.random.normal(next(keys), shape)).astype(jnp.float32)

    params = {
        "pos_embedding": nrm((1, num_patches + 1, dim), 1.0),
        "cls_token": nrm((1, 1, dim), 1.0),
        "pe_w": nrm((dim, patch_dim)),
        "pe_b": jnp.zeros((dim,), jnp.float32),
        "h1_w": nrm((mlp_dim, dim)),
        "h1_b": jnp.zeros((mlp_dim,), jnp.float32),
        "h2_w": nrm((num_classes, mlp_dim)),
        "h2_b": jnp.zeros((num_classes,), jnp.float32),
        "layers": [],
    }
    for _ in range(depth):
        params["layers"].append({
            "in_w": nrm((3 * dim, dim)),
            "in_b": jnp.zeros((3 * dim,), jnp.float32),
            "out_w": nrm((dim, dim)),
            "out_b": jnp.zeros((dim,), jnp.float32),
            "ln1_g": jnp.ones((dim,), jnp.float32),
            "ln1_b": jnp.zeros((dim,), jnp.float32),
            "ff1_w": nrm((mlp_dim, dim)),
            "ff1_b": jnp.zeros((mlp_dim,), jnp.float32),
            "ff2_w": nrm((dim, mlp_dim)),
            "ff2_b": jnp.zeros((dim,), jnp.float32),
            "ln2_g": jnp.ones((dim,), jnp.float32),
            "ln2_b": jnp.zeros((dim,), jnp.float32),
        })
    return params


def prepare_params(params):
    """One-time prep: transpose matmul weights to (in, out) bf16, pack per-layer
    weights into 3 depth-stacked slabs and all biases/LN params into one f32
    slab, and build the prologue (pe_b / pos / cls) slab with aligned rows."""
    f32, bf16 = jnp.float32, jnp.bfloat16

    pos = params["pos_embedding"][0]                 # (N, D)
    N, D = pos.shape
    P = N - 1
    P_pad = _round_up(P, 8)
    cls = params["cls_token"][0, 0]                  # (D,)

    prol = jnp.zeros((8 + P_pad + 8, D), f32)
    prol = prol.at[0, :].set(params["pe_b"])         # row 0: patch-embed bias
    prol = prol.at[8:8 + P, :].set(pos[1:N])         # rows 8..: pos for patches
    prol = prol.at[8 + P_pad, :].set(cls + pos[0])   # tail row 0: cls + pos[0]

    def w_t(w):
        return jnp.asarray(w.T, bf16)

    F = params["layers"][0]["ff1_w"].shape[0]
    W = max(3 * D, F)
    wa, wb, pv = [], [], []
    for lp in params["layers"]:
        wa.append(jnp.concatenate([w_t(lp["in_w"]), w_t(lp["ff1_w"])], axis=1))
        wb.append(jnp.concatenate([w_t(lp["out_w"]), w_t(lp["ff2_w"])], axis=0))
        rows = [lp["in_b"], lp["out_b"], lp["ln1_g"], lp["ln1_b"],
                lp["ff1_b"], lp["ff2_b"], lp["ln2_g"], lp["ln2_b"]]
        pv.append(jnp.stack(
            [jnp.zeros((W,), f32).at[:r.shape[0]].set(r) for r in rows]))

    C = params["h2_w"].shape[0]
    Wh = max(F, C)
    hb = jnp.zeros((2, Wh), f32)
    hb = hb.at[0, :F].set(params["h1_b"])
    hb = hb.at[1, :C].set(params["h2_b"])

    return {
        "pe_w": w_t(params["pe_w"]),
        "prol": prol,
        "wa": jnp.stack(wa),          # (depth, D, 3D+F) bf16
        "wb": jnp.stack(wb),          # (depth, D+F, D)  bf16
        "pv": jnp.stack(pv),          # (depth, 8, W)    f32
        "hw1": w_t(params["h1_w"]),   # (D, F) bf16
        "hw2": w_t(params["h2_w"]),   # (F, C) bf16
        "hb": hb,                     # (2, max(F, C)) f32
    }


if __name__ == "__main__":
    # small, lane-dense config consistent with the module structure
    cfg = dict(image_size=32, patch_size=8, channels=3, dim=128, depth=2,
               heads=4, mlp_dim=256, num_classes=10)
    batch = 2
    assert cfg["dim"] % cfg["heads"] == 0

    key = jax.random.PRNGKey(0)
    k_img, k_par = jax.random.split(key)
    img = jax.random.normal(
        k_img, (batch, cfg["channels"], cfg["image_size"], cfg["image_size"]),
        jnp.float32)

    params = init_params(k_par, **cfg)
    kparams = prepare_params(params)   # one-time weight prep (slabs, bf16, transposes)

    fwd = jax.jit(functools.partial(vit_forward,
                                    patch_size=cfg["patch_size"],
                                    heads=cfg["heads"]))
    out = fwd(img, kparams)
    out = jax.block_until_ready(out)

    assert out.shape == (batch, cfg["num_classes"])
    assert bool(jnp.all(jnp.isfinite(out)))
    print("KERNEL_OK")
</pallas_src>

<mosaic_0001>
module attributes {stable_mosaic.version = 11 : i64} {
  func.func @_vit_kernel(%arg0: i32, %arg1: memref<32x192xf32, #tpu.memory_space<vmem>>, %arg2: memref<192x128xbf16, #tpu.memory_space<vmem>>, %arg3: memref<32x128xf32, #tpu.memory_space<vmem>>, %arg4: memref<1x128x640xbf16, #tpu.memory_space<vmem>>, %arg5: memref<1x384x128xbf16, #tpu.memory_space<vmem>>, %arg6: memref<1x8x384xf32, #tpu.memory_space<vmem>>, %arg7: memref<128x256xbf16, #tpu.memory_space<vmem>>, %arg8: memref<256x10xbf16, #tpu.memory_space<vmem>>, %arg9: memref<2x256xf32, #tpu.memory_space<vmem>>, %arg10: memref<2x10xf32, #tpu.memory_space<vmem>>, %arg11: memref<48x128xf32, #tpu.memory_space<vmem>>) attributes {dimension_semantics = [#tpu.dimension_semantics<arbitrary>], iteration_bounds = array<i64: 2>, scalar_prefetch = 0 : i64, scratch_operands = 1 : i64, tpu.core_type = #tpu.core_type<tc>, window_params = [{pipeline_mode = #tpu.pipeline_mode<synchronous>, transform_indices = @transform_0, window_bounds = array<i64: 32, 192>}, {pipeline_mode = #tpu.pipeline_mode<synchronous>, transform_indices = @transform_1, window_bounds = array<i64: 192, 128>}, {pipeline_mode = #tpu.pipeline_mode<synchronous>, transform_indices = @transform_2, window_bounds = array<i64: 32, 128>}, {transform_indices = @transform_3, window_bounds = array<i64: 1, 128, 640>}, {transform_indices = @transform_4, window_bounds = array<i64: 1, 384, 128>}, {transform_indices = @transform_5, window_bounds = array<i64: 1, 8, 384>}, {pipeline_mode = #tpu.pipeline_mode<synchronous>, transform_indices = @transform_6, window_bounds = array<i64: 128, 256>}, {pipeline_mode = #tpu.pipeline_mode<synchronous>, transform_indices = @transform_7, window_bounds = array<i64: 256, 10>}, {pipeline_mode = #tpu.pipeline_mode<synchronous>, transform_indices = @transform_8, window_bounds = array<i64: 2, 256>}, {pipeline_mode = #tpu.pipeline_mode<synchronous>, transform_indices = @transform_9, window_bounds = array<i64: 2, 10>}]} {
    %c0 = arith.constant 0 : index
    %c0_0 = arith.constant 0 : index
    %0 = vector.load %arg1[%c0, %c0_0] : memref<32x192xf32, #tpu.memory_space<vmem>>, vector<32x192xf32>
    %1 = arith.truncf %0 : vector<32x192xf32> to vector<32x192xbf16>
    %c0_1 = arith.constant 0 : index
    %c0_2 = arith.constant 0 : index
    %2 = vector.load %arg2[%c0_1, %c0_2] : memref<192x128xbf16, #tpu.memory_space<vmem>>, vector<192x128xbf16>
    %cst = arith.constant dense<0.000000e+00> : vector<32x128xf32>
    %3 = tpu.matmul %1, %2, %cst {dimension_numbers = #tpu.dot_dimension_numbers<[1], [0], [0], [1], [0, 0, 1, 1], [], []>} : vector<32x192xbf16>, vector<192x128xbf16>, vector<32x128xf32> -> vector<32x128xf32>
    %c0_3 = arith.constant 0 : index
    %c0_4 = arith.constant 0 : index
    %4 = vector.load %arg3[%c0_3, %c0_4] : memref<32x128xf32, #tpu.memory_space<vmem>>, vector<1x128xf32>
    %5 = vector.broadcast %4 : vector<1x128xf32> to vector<32x128xf32>
    %6 = arith.addf %3, %5 : vector<32x128xf32>
    %c8 = arith.constant 8 : index
    %c0_5 = arith.constant 0 : index
    %7 = vector.load %arg3[%c8, %c0_5] : memref<32x128xf32, #tpu.memory_space<vmem>>, vector<16x128xf32>
    %c24 = arith.constant 24 : index
    %c0_6 = arith.constant 0 : index
    %8 = vector.load %arg3[%c24, %c0_6] : memref<32x128xf32, #tpu.memory_space<vmem>>, vector<8x128xf32>
    %c0_i32 = arith.constant 0 : i32
    %9 = arith.cmpi eq, %arg0, %c0_i32 : i32
    %10 = arith.extui %9 : i1 to i32
    %c0_i32_7 = arith.constant 0 : i32
    %11 = arith.cmpi ne, %10, %c0_i32_7 : i32
    scf.if %11 {
      %250 = vector.extract_strided_slice %6 {offsets = [0, 0], sizes = [16, 128], strides = [1, 1]} : vector<32x128xf32> to vector<16x128xf32>
      %251 = arith.addf %250, %7 : vector<16x128xf32>
      %c0_94 = arith.constant 0 : index
      %c0_95 = arith.constant 0 : index
      %252 = vector.load %arg11[%c0_94, %c0_95] : memref<48x128xf32, #tpu.memory_space<vmem>>, vector<16x128xf32>
      tpu.vector_store %arg11[%c0_94, %c0_95], %251 {strides = array<i32>} : memref<48x128xf32, #tpu.memory_space<vmem>>, vector<16x128xf32>,
      %c16 = arith.constant 16 : index
      %c0_96 = arith.constant 0 : index
      %253 = vector.load %arg11[%c16, %c0_96] : memref<48x128xf32, #tpu.memory_space<vmem>>, vector<8x128xf32>
      tpu.vector_store %arg11[%c16, %c0_96], %8 {strides = array<i32>} : memref<48x128xf32, #tpu.memory_space<vmem>>, vector<8x128xf32>,
      %254 = vector.extract_strided_slice %6 {offsets = [16, 0], sizes = [16, 128], strides = [1, 1]} : vector<32x128xf32> to vector<16x128xf32>
      %255 = arith.addf %254, %7 : vector<16x128xf32>
      %c24_97 = arith.constant 24 : index
      %c0_98 = arith.constant 0 : index
      %256 = vector.load %arg11[%c24_97, %c0_98] : memref<48x128xf32, #tpu.memory_space<vmem>>, vector<16x128xf32>
      tpu.vector_store %arg11[%c24_97, %c0_98], %255 {strides = array<i32>} : memref<48x128xf32, #tpu.memory_space<vmem>>, vector<16x128xf32>,
      %c40 = arith.constant 40 : index
      %c0_99 = arith.constant 0 : index
      %257 = vector.load %arg11[%c40, %c0_99] : memref<48x128xf32, #tpu.memory_space<vmem>>, vector<8x128xf32>
      tpu.vector_store %arg11[%c40, %c0_99], %8 {strides = array<i32>} : memref<48x128xf32, #tpu.memory_space<vmem>>, vector<8x128xf32>,
    } else {
    }
    %c0_8 = arith.constant 0 : index
    %c0_9 = arith.constant 0 : index
    %12 = vector.load %arg11[%c0_8, %c0_9] : memref<48x128xf32, #tpu.memory_space<vmem>>, vector<48x128xf32>
    %13 = arith.truncf %12 : vector<48x128xf32> to vector<48x128xbf16>
    %c0_10 = arith.constant 0 : index
    %c0_11 = arith.constant 0 : index
    %c0_12 = arith.constant 0 : index
    %14 = vector.load %arg4[%c0_10, %c0_11, %c0_12] : memref<1x128x640xbf16, #tpu.memory_space<vmem>>, vector<1x128x384xbf16>
    %15 = vector.shape_cast %14 : vector<1x128x384xbf16> to vector<128x384xbf16>
    %c0_13 = arith.constant 0 : index
    %c0_14 = arith.constant 0 : index
    %c384 = arith.constant 384 : index
    %16 = vector.load %arg4[%c0_13, %c0_14, %c384] : memref<1x128x640xbf16, #tpu.memory_space<vmem>>, vector<1x128x256xbf16>
    %17 = vector.shape_cast %16 : vector<1x128x256xbf16> to vector<128x256xbf16>
    %c0_15 = arith.constant 0 : index
    %c0_16 = arith.constant 0 : index
    %c0_17 = arith.constant 0 : index
    %18 = vector.load %arg5[%c0_15, %c0_16, %c0_17] : memref<1x384x128xbf16, #tpu.memory_space<vmem>>, vector<1x128x128xbf16>
    %19 = vector.shape_cast %18 : vector<1x128x128xbf16> to vector<128x128xbf16>
    %c0_18 = arith.constant 0 : index
    %c128 = arith.constant 128 : index
    %c0_19 = arith.constant 0 : index
    %20 = vector.load %arg5[%c0_18, %c128, %c0_19] : memref<1x384x128xbf16, #tpu.memory_space<vmem>>, vector<1x256x128xbf16>
    %21 = vector.shape_cast %20 : vector<1x256x128xbf16> to vector<256x128xbf16>
    %22 = tpu.iota {dimensions = array<i32: 0>} : vector<128x4xi32>
    %23 = tpu.iota {dimensions = array<i32: 1>} : vector<128x4xi32>
    %c32_i32 = arith.constant 32 : i32
    %24 = vector.broadcast %c32_i32 : i32 to vector<128x4xi32>
    %25 = arith.muli %23, %24 : vector<128x4xi32>
    %26 = arith.cmpi sge, %22, %25 : vector<128x4xi32>
    %c1_i32 = arith.constant 1 : i32
    %27 = vector.broadcast %c1_i32 : i32 to vector<128x4xi32>
    %28 = arith.addi %23, %27 : vector<128x4xi32>
    %c32_i32_20 = arith.constant 32 : i32
    %29 = vector.broadcast %c32_i32_20 : i32 to vector<128x4xi32>
    %30 = arith.muli %28, %29 : vector<128x4xi32>
    %31 = arith.cmpi slt, %22, %30 : vector<128x4xi32>
    %32 = arith.andi %26, %31 : vector<128x4xi1>
    %cst_21 = arith.constant 0.176776692 : f32
    %cst_22 = arith.constant 0.000000e+00 : f32
    %33 = vector.broadcast %cst_21 : f32 to vector<128x4xf32>
    %34 = vector.broadcast %cst_22 : f32 to vector<128x4xf32>
    %35 = arith.select %32, %33, %34 : vector<128x4xi1>, vector<128x4xf32>
    %36 = tpu.iota {dimensions = array<i32: 0>} : vector<4x128xi32>
    %37 = tpu.iota {dimensions = array<i32: 1>} : vector<4x128xi32>
    %c32_i32_23 = arith.constant 32 : i32
    %38 = vector.broadcast %c32_i32_23 : i32 to vector<4x128xi32>
    %39 = arith.muli %36, %38 : vector<4x128xi32>
    %40 = arith.cmpi sge, %37, %39 : vector<4x128xi32>
    %c1_i32_24 = arith.constant 1 : i32
    %41 = vector.broadcast %c1_i32_24 : i32 to vector<4x128xi32>
    %42 = arith.addi %36, %41 : vector<4x128xi32>
    %c32_i32_25 = arith.constant 32 : i32
    %43 = vector.broadcast %c32_i32_25 : i32 to vector<4x128xi32>
    %44 = arith.muli %42, %43 : vector<4x128xi32>
    %45 = arith.cmpi slt, %37, %44 : vector<4x128xi32>
    %46 = arith.andi %40, %45 : vector<4x128xi1>
    %cst_26 = arith.constant 1.000000e+00 : f32
    %cst_27 = arith.constant 0.000000e+00 : f32
    %47 = vector.broadcast %cst_26 : f32 to vector<4x128xf32>
    %48 = vector.broadcast %cst_27 : f32 to vector<4x128xf32>
    %49 = arith.select %46, %47, %48 : vector<4x128xi1>, vector<4x128xf32>
    %cst_28 = arith.constant dense<0.000000e+00> : vector<48x384xf32>
    %50 = tpu.matmul %13, %15, %cst_28 {dimension_numbers = #tpu.dot_dimension_numbers<[1], [0], [0], [1], [0, 0, 1, 1], [], []>} : vector<48x128xbf16>, vector<128x384xbf16>, vector<48x384xf32> -> vector<48x384xf32>
    %c0_29 = arith.constant 0 : index
    %c0_30 = arith.constant 0 : index
    %c0_31 = arith.constant 0 : index
    %51 = vector.load %arg6[%c0_29, %c0_30, %c0_31] : memref<1x8x384xf32, #tpu.memory_space<vmem>>, vector<1x1x384xf32>
    %52 = vector.shape_cast %51 : vector<1x1x384xf32> to vector<1x384xf32>
    %53 = vector.broadcast %52 : vector<1x384xf32> to vector<48x384xf32>
    %54 = arith.addf %50, %53 : vector<48x384xf32>
    %55 = vector.extract_strided_slice %54 {offsets = [0, 0], sizes = [48, 128], strides = [1, 1]} : vector<48x384xf32> to vector<48x128xf32>
    %56 = vector.extract_strided_slice %54 {offsets = [0, 128], sizes = [48, 128], strides = [1, 1]} : vector<48x384xf32> to vector<48x128xf32>
    %57 = vector.extract_strided_slice %54 {offsets = [0, 256], sizes = [48, 128], strides = [1, 1]} : vector<48x384xf32> to vector<48x128xf32>
    %58 = vector.extract_strided_slice %55 {offsets = [0, 0], sizes = [24, 128], strides = [1, 1]} : vector<48x128xf32> to vector<24x128xf32>
    %59 = vector.extract_strided_slice %56 {offsets = [0, 0], sizes = [24, 128], strides = [1, 1]} : vector<48x128xf32> to vector<24x128xf32>
    %60 = arith.mulf %58, %59 : vector<24x128xf32>
    %61 = vector.extract_strided_slice %55 {offsets = [0, 0], sizes = [24, 128], strides = [1, 1]} : vector<48x128xf32> to vector<24x128xf32>
    %62 = vector.extract_strided_slice %56 {offsets = [24, 0], sizes = [24, 128], strides = [1, 1]} : vector<48x128xf32> to vector<24x128xf32>
    %63 = arith.mulf %61, %62 : vector<24x128xf32>
    %64 = vector.extract_strided_slice %55 {offsets = [24, 0], sizes = [24, 128], strides = [1, 1]} : vector<48x128xf32> to vector<24x128xf32>
    %65 = vector.extract_strided_slice %56 {offsets = [0, 0], sizes = [24, 128], strides = [1, 1]} : vector<48x128xf32> to vector<24x128xf32>
    %66 = arith.mulf %64, %65 : vector<24x128xf32>
    %67 = vector.extract_strided_slice %55 {offsets = [24, 0], sizes = [24, 128], strides = [1, 1]} : vector<48x128xf32> to vector<24x128xf32>
    %68 = vector.extract_strided_slice %56 {offsets = [24, 0], sizes = [24, 128], strides = [1, 1]} : vector<48x128xf32> to vector<24x128xf32>
    %69 = arith.mulf %67, %68 : vector<24x128xf32>
    %70 = tpu.concatenate %60, %63, %66, %69 in 0 : vector<24x128xf32>, vector<24x128xf32>, vector<24x128xf32>, vector<24x128xf32> -> vector<96x128xf32>
    %cst_32 = arith.constant dense<0.000000e+00> : vector<96x4xf32>
    %71 = tpu.matmul %70, %35, %cst_32 {dimension_numbers = #tpu.dot_dimension_numbers<[1], [0], [0], [1], [0, 0, 1, 1], [], []>} : vector<96x128xf32>, vector<128x4xf32>, vector<96x4xf32> -> vector<96x4xf32>
    %72 = vector.extract_strided_slice %71 {offsets = [0, 0], sizes = [24, 4], strides = [1, 1]} : vector<96x4xf32> to vector<24x4xf32>
    %73 = vector.extract_strided_slice %71 {offsets = [24, 0], sizes = [24, 4], strides = [1, 1]} : vector<96x4xf32> to vector<24x4xf32>
    %74 = arith.maximumf %72, %73 : vector<24x4xf32>
    %75 = arith.subf %72, %74 : vector<24x4xf32>
    %76 = math.exp %75 : vector<24x4xf32>
    %77 = arith.subf %73, %74 : vector<24x4xf32>
    %78 = math.exp %77 : vector<24x4xf32>
    %79 = arith.addf %76, %78 : vector<24x4xf32>
    %80 = tpu.reciprocal %79 {approx = true} : vector<24x4xf32> -> vector<24x4xf32>
    %81 = arith.mulf %76, %80 : vector<24x4xf32>
    %82 = arith.mulf %78, %80 : vector<24x4xf32>
    %83 = vector.extract_strided_slice %71 {offsets = [48, 0], sizes = [24, 4], strides = [1, 1]} : vector<96x4xf32> to vector<24x4xf32>
    %84 = vector.extract_strided_slice %71 {offsets = [72, 0], sizes = [24, 4], strides = [1, 1]} : vector<96x4xf32> to vector<24x4xf32>
    %85 = arith.maximumf %83, %84 : vector<24x4xf32>
    %86 = arith.subf %83, %85 : vector<24x4xf32>
    %87 = math.exp %86 : vector<24x4xf32>
    %88 = arith.subf %84, %85 : vector<24x4xf32>
    %89 = math.exp %88 : vector<24x4xf32>
    %90 = arith.addf %87, %89 : vector<24x4xf32>
    %91 = tpu.reciprocal %90 {approx = true} : vector<24x4xf32> -> vector<24x4xf32>
    %92 = arith.mulf %87, %91 : vector<24x4xf32>
    %93 = arith.mulf %89, %91 : vector<24x4xf32>
    %94 = tpu.concatenate %81, %82, %92, %93 in 0 : vector<24x4xf32>, vector<24x4xf32>, vector<24x4xf32>, vector<24x4xf32> -> vector<96x4xf32>
    %cst_33 = arith.constant dense<0.000000e+00> : vector<96x128xf32>
    %95 = tpu.matmul %94, %49, %cst_33 {dimension_numbers = #tpu.dot_dimension_numbers<[1], [0], [0], [1], [0, 0, 1, 1], [], []>} : vector<96x4xf32>, vector<4x128xf32>, vector<96x128xf32> -> vector<96x128xf32>
    %96 = vector.extract_strided_slice %95 {offsets = [0, 0], sizes = [24, 128], strides = [1, 1]} : vector<96x128xf32> to vector<24x128xf32>
    %97 = vector.extract_strided_slice %57 {offsets = [0, 0], sizes = [24, 128], strides = [1, 1]} : vector<48x128xf32> to vector<24x128xf32>
    %98 = arith.mulf %96, %97 : vector<24x128xf32>
    %99 = vector.extract_strided_slice %95 {offsets = [24, 0], sizes = [24, 128], strides = [1, 1]} : vector<96x128xf32> to vector<24x128xf32>
    %100 = vector.extract_strided_slice %57 {offsets = [24, 0], sizes = [24, 128], strides = [1, 1]} : vector<48x128xf32> to vector<24x128xf32>
    %101 = arith.mulf %99, %100 : vector<24x128xf32>
    %102 = arith.addf %98, %101 : vector<24x128xf32>
    %103 = vector.extract_strided_slice %95 {offsets = [48, 0], sizes = [24, 128], strides = [1, 1]} : vector<96x128xf32> to vector<24x128xf32>
    %104 = vector.extract_strided_slice %57 {offsets = [0, 0], sizes = [24, 128], strides = [1, 1]} : vector<48x128xf32> to vector<24x128xf32>
    %105 = arith.mulf %103, %104 : vector<24x128xf32>
    %106 = vector.extract_strided_slice %95 {offsets = [72, 0], sizes = [24, 128], strides = [1, 1]} : vector<96x128xf32> to vector<24x128xf32>
    %107 = vector.extract_strided_slice %57 {offsets = [24, 0], sizes = [24, 128], strides = [1, 1]} : vector<48x128xf32> to vector<24x128xf32>
    %108 = arith.mulf %106, %107 : vector<24x128xf32>
    %109 = arith.addf %105, %108 : vector<24x128xf32>
    %110 = tpu.concatenate %102, %109 in 0 : vector<24x128xf32>, vector<24x128xf32> -> vector<48x128xf32>
    %111 = arith.truncf %110 : vector<48x128xf32> to vector<48x128xbf16>
    %cst_34 = arith.constant dense<0.000000e+00> : vector<48x128xf32>
    %112 = tpu.matmul %111, %19, %cst_34 {dimension_numbers = #tpu.dot_dimension_numbers<[1], [0], [0], [1], [0, 0, 1, 1], [], []>} : vector<48x128xbf16>, vector<128x128xbf16>, vector<48x128xf32> -> vector<48x128xf32>
    %c0_35 = arith.constant 0 : index
    %c1 = arith.constant 1 : index
    %c0_36 = arith.constant 0 : index
    %113 = vector.load %arg6[%c0_35, %c1, %c0_36] : memref<1x8x384xf32, #tpu.memory_space<vmem>>, vector<1x1x128xf32>
    %114 = vector.shape_cast %113 : vector<1x1x128xf32> to vector<1x128xf32>
    %115 = vector.broadcast %114 : vector<1x128xf32> to vector<48x128xf32>
    %116 = arith.addf %112, %115 : vector<48x128xf32>
    %117 = arith.addf %12, %116 : vector<48x128xf32>
    %cst_37 = arith.constant dense<0.000000e+00> : vector<48xf32>
    %118 = vector.multi_reduction <add>, %117, %cst_37 [1] : vector<48x128xf32> to vector<48xf32>
    %119 = vector.shape_cast %118 : vector<48xf32> to vector<48x1xf32>
    %cst_38 = arith.constant 1.280000e+02 : f32
    %120 = vector.broadcast %cst_38 : f32 to vector<48x1xf32>
    %121 = arith.divf %119, %120 : vector<48x1xf32>
    %122 = vector.broadcast %121 : vector<48x1xf32> to vector<48x128xf32>
    %123 = arith.subf %117, %122 : vector<48x128xf32>
    %124 = arith.mulf %123, %123 : vector<48x128xf32>
    %cst_39 = arith.constant dense<0.000000e+00> : vector<48xf32>
    %125 = vector.multi_reduction <add>, %124, %cst_39 [1] : vector<48x128xf32> to vector<48xf32>
    %126 = vector.shape_cast %125 : vector<48xf32> to vector<48x1xf32>
    %cst_40 = arith.constant 1.280000e+02 : f32
    %127 = vector.broadcast %cst_40 : f32 to vector<48x1xf32>
    %128 = arith.divf %126, %127 : vector<48x1xf32>
    %129 = vector.broadcast %121 : vector<48x1xf32> to vector<48x128xf32>
    %130 = arith.subf %117, %129 : vector<48x128xf32>
    %cst_41 = arith.constant 9.99999974E-6 : f32
    %131 = vector.broadcast %cst_41 : f32 to vector<48x1xf32>
    %132 = arith.addf %128, %131 : vector<48x1xf32>
    %133 = math.rsqrt %132 : vector<48x1xf32>
    %134 = vector.broadcast %133 : vector<48x1xf32> to vector<48x128xf32>
    %135 = arith.mulf %130, %134 : vector<48x128xf32>
    %c0_42 = arith.constant 0 : index
    %c2 = arith.constant 2 : index
    %c0_43 = arith.constant 0 : index
    %136 = vector.load %arg6[%c0_42, %c2, %c0_43] : memref<1x8x384xf32, #tpu.memory_space<vmem>>, vector<1x1x128xf32>
    %137 = vector.shape_cast %136 : vector<1x1x128xf32> to vector<1x128xf32>
    %138 = vector.broadcast %137 : vector<1x128xf32> to vector<48x128xf32>
    %139 = arith.mulf %135, %138 : vector<48x128xf32>
    %c0_44 = arith.constant 0 : index
    %c3 = arith.constant 3 : index
    %c0_45 = arith.constant 0 : index
    %140 = vector.load %arg6[%c0_44, %c3, %c0_45] : memref<1x8x384xf32, #tpu.memory_space<vmem>>, vector<1x1x128xf32>
    %141 = vector.shape_cast %140 : vector<1x1x128xf32> to vector<1x128xf32>
    %142 = vector.broadcast %141 : vector<1x128xf32> to vector<48x128xf32>
    %143 = arith.addf %139, %142 : vector<48x128xf32>
    %144 = arith.truncf %143 : vector<48x128xf32> to vector<48x128xbf16>
    %cst_46 = arith.constant dense<0.000000e+00> : vector<48x256xf32>
    %145 = tpu.matmul %144, %17, %cst_46 {dimension_numbers = #tpu.dot_dimension_numbers<[1], [0], [0], [1], [0, 0, 1, 1], [], []>} : vector<48x128xbf16>, vector<128x256xbf16>, vector<48x256xf32> -> vector<48x256xf32>
    %c0_47 = arith.constant 0 : index
    %c4 = arith.constant 4 : index
    %c0_48 = arith.constant 0 : index
    %146 = vector.load %arg6[%c0_47, %c4, %c0_48] : memref<1x8x384xf32, #tpu.memory_space<vmem>>, vector<1x1x256xf32>
    %147 = vector.shape_cast %146 : vector<1x1x256xf32> to vector<1x256xf32>
    %148 = vector.broadcast %147 : vector<1x256xf32> to vector<48x256xf32>
    %149 = arith.addf %145, %148 : vector<48x256xf32>
    %cst_49 = arith.constant 0.000000e+00 : f32
    %150 = vector.broadcast %cst_49 : f32 to vector<48x256xf32>
    %151 = arith.maximumf %149, %150 : vector<48x256xf32>
    %152 = arith.truncf %151 : vector<48x256xf32> to vector<48x256xbf16>
    %cst_50 = arith.constant dense<0.000000e+00> : vector<48x128xf32>
    %153 = tpu.matmul %152, %21, %cst_50 {dimension_numbers = #tpu.dot_dimension_numbers<[1], [0], [0], [1], [0, 0, 1, 1], [], []>} : vector<48x256xbf16>, vector<256x128xbf16>, vector<48x128xf32> -> vector<48x128xf32>
    %c0_51 = arith.constant 0 : index
    %c5 = arith.constant 5 : index
    %c0_52 = arith.constant 0 : index
    %154 = vector.load %arg6[%c0_51, %c5, %c0_52] : memref<1x8x384xf32, #tpu.memory_space<vmem>>, vector<1x1x128xf32>
    %155 = vector.shape_cast %154 : vector<1x1x128xf32> to vector<1x128xf32>
    %156 = vector.broadcast %155 : vector<1x128xf32> to vector<48x128xf32>
    %157 = arith.addf %153, %156 : vector<48x128xf32>
    %158 = arith.addf %143, %157 : vector<48x128xf32>
    %cst_53 = arith.constant dense<0.000000e+00> : vector<48xf32>
    %159 = vector.multi_reduction <add>, %158, %cst_53 [1] : vector<48x128xf32> to vector<48xf32>
    %160 = vector.shape_cast %159 : vector<48xf32> to vector<48x1xf32>
    %cst_54 = arith.constant 1.280000e+02 : f32
    %161 = vector.broadcast %cst_54 : f32 to vector<48x1xf32>
    %162 = arith.divf %160, %161 : vector<48x1xf32>
    %163 = vector.broadcast %162 : vector<48x1xf32> to vector<48x128xf32>
    %164 = arith.subf %158, %163 : vector<48x128xf32>
    %165 = arith.mulf %164, %164 : vector<48x128xf32>
    %cst_55 = arith.constant dense<0.000000e+00> : vector<48xf32>
    %166 = vector.multi_reduction <add>, %165, %cst_55 [1] : vector<48x128xf32> to vector<48xf32>
    %167 = vector.shape_cast %166 : vector<48xf32> to vector<48x1xf32>
    %cst_56 = arith.constant 1.280000e+02 : f32
    %168 = vector.broadcast %cst_56 : f32 to vector<48x1xf32>
    %169 = arith.divf %167, %168 : vector<48x1xf32>
    %170 = vector.broadcast %162 : vector<48x1xf32> to vector<48x128xf32>
    %171 = arith.subf %158, %170 : vector<48x128xf32>
    %cst_57 = arith.constant 9.99999974E-6 : f32
    %172 = vector.broadcast %cst_57 : f32 to vector<48x1xf32>
    %173 = arith.addf %169, %172 : vector<48x1xf32>
    %174 = math.rsqrt %173 : vector<48x1xf32>
    %175 = vector.broadcast %174 : vector<48x1xf32> to vector<48x128xf32>
    %176 = arith.mulf %171, %175 : vector<48x128xf32>
    %c0_58 = arith.constant 0 : index
    %c6 = arith.constant 6 : index
    %c0_59 = arith.constant 0 : index
    %177 = vector.load %arg6[%c0_58, %c6, %c0_59] : memref<1x8x384xf32, #tpu.memory_space<vmem>>, vector<1x1x128xf32>
    %178 = vector.shape_cast %177 : vector<1x1x128xf32> to vector<1x128xf32>
    %179 = vector.broadcast %178 : vector<1x128xf32> to vector<48x128xf32>
    %180 = arith.mulf %176, %179 : vector<48x128xf32>
    %c0_60 = arith.constant 0 : index
    %c7 = arith.constant 7 : index
    %c0_61 = arith.constant 0 : index
    %181 = vector.load %arg6[%c0_60, %c7, %c0_61] : memref<1x8x384xf32, #tpu.memory_space<vmem>>, vector<1x1x128xf32>
    %182 = vector.shape_cast %181 : vector<1x1x128xf32> to vector<1x128xf32>
    %183 = vector.broadcast %182 : vector<1x128xf32> to vector<48x128xf32>
    %184 = arith.addf %180, %183 : vector<48x128xf32>
    %c0_62 = arith.constant 0 : index
    %c0_63 = arith.constant 0 : index
    %185 = vector.load %arg11[%c0_62, %c0_63] : memref<48x128xf32, #tpu.memory_space<vmem>>, vector<48x128xf32>
    tpu.vector_store %arg11[%c0_62, %c0_63], %184 {strides = array<i32>} : memref<48x128xf32, #tpu.memory_space<vmem>>, vector<48x128xf32>,
    %186 = tpu.iota {dimensions = array<i32: 0>} : vector<2x48xi32>
    %187 = tpu.iota {dimensions = array<i32: 1>} : vector<2x48xi32>
    %c24_i32 = arith.constant 24 : i32
    %188 = vector.broadcast %c24_i32 : i32 to vector<2x48xi32>
    %189 = arith.muli %186, %188 : vector<2x48xi32>
    %c16_i32 = arith.constant 16 : i32
    %190 = vector.broadcast %c16_i32 : i32 to vector<2x48xi32>
    %191 = arith.addi %189, %190 : vector<2x48xi32>
    %192 = arith.cmpi eq, %187, %191 : vector<2x48xi32>
    %cst_64 = arith.constant 1.000000e+00 : f32
    %cst_65 = arith.constant 0.000000e+00 : f32
    %193 = vector.broadcast %cst_64 : f32 to vector<2x48xf32>
    %194 = vector.broadcast %cst_65 : f32 to vector<2x48xf32>
    %195 = arith.select %192, %193, %194 : vector<2x48xi1>, vector<2x48xf32>
    %cst_66 = arith.constant dense<0.000000e+00> : vector<2x128xf32>
    %196 = tpu.matmul %195, %184, %cst_66 {dimension_numbers = #tpu.dot_dimension_numbers<[1], [0], [0], [1], [0, 0, 1, 1], [], []>} : vector<2x48xf32>, vector<48x128xf32>, vector<2x128xf32> -> vector<2x128xf32>
    %197 = arith.truncf %196 : vector<2x128xf32> to vector<2x128xbf16>
    %c0_67 = arith.constant 0 : index
    %c0_68 = arith.constant 0 : index
    %198 = vector.load %arg7[%c0_67, %c0_68] : memref<128x256xbf16, #tpu.memory_space<vmem>>, vector<128x256xbf16>
    %cst_69 = arith.constant dense<0.000000e+00> : vector<2x256xf32>
    %199 = tpu.matmul %197, %198, %cst_69 {dimension_numbers = #tpu.dot_dimension_numbers<[1], [0], [0], [1], [0, 0, 1, 1], [], []>} : vector<2x128xbf16>, vector<128x256xbf16>, vector<2x256xf32> -> vector<2x256xf32>
    %c0_70 = arith.constant 0 : index
    %c0_71 = arith.constant 0 : index
    %200 = vector.load %arg9[%c0_70, %c0_71] : memref<2x256xf32, #tpu.memory_space<vmem>>, vector<1x256xf32>
    %201 = vector.broadcast %200 : vector<1x256xf32> to vector<2x256xf32>
    %202 = arith.addf %199, %201 : vector<2x256xf32>
    %cst_72 = arith.constant 5.000000e-01 : f32
    %203 = vector.broadcast %cst_72 : f32 to vector<2x256xf32>
    %204 = arith.mulf %203, %202 : vector<2x256xf32>
    %cst_73 = arith.constant 0.707106769 : f32
    %205 = vector.broadcast %cst_73 : f32 to vector<2x256xf32>
    %206 = arith.mulf %202, %205 : vector<2x256xf32>
    %207 = math.absf %206 : vector<2x256xf32>
    %cst_74 = arith.constant 0.327591091 : f32
    %208 = vector.broadcast %cst_74 : f32 to vector<2x256xf32>
    %209 = arith.mulf %208, %207 : vector<2x256xf32>
    %cst_75 = arith.constant 1.000000e+00 : f32
    %210 = vector.broadcast %cst_75 : f32 to vector<2x256xf32>
    %211 = arith.addf %210, %209 : vector<2x256xf32>
    %cst_76 = arith.constant 1.000000e+00 : f32
    %212 = vector.broadcast %cst_76 : f32 to vector<2x256xf32>
    %213 = arith.divf %212, %211 : vector<2x256xf32>
    %cst_77 = arith.constant 1.06140542 : f32
    %214 = vector.broadcast %cst_77 : f32 to vector<2x256xf32>
    %215 = arith.mulf %214, %213 : vector<2x256xf32>
    %cst_78 = arith.constant -1.45315206 : f32
    %216 = vector.broadcast %cst_78 : f32 to vector<2x256xf32>
    %217 = arith.addf %215, %216 : vector<2x256xf32>
    %218 = arith.mulf %217, %213 : vector<2x256xf32>
    %cst_79 = arith.constant 1.42141378 : f32
    %219 = vector.broadcast %cst_79 : f32 to vector<2x256xf32>
    %220 = arith.addf %218, %219 : vector<2x256xf32>
    %221 = arith.mulf %220, %213 : vector<2x256xf32>
    %cst_80 = arith.constant -0.284496725 : f32
    %222 = vector.broadcast %cst_80 : f32 to vector<2x256xf32>
    %223 = arith.addf %221, %222 : vector<2x256xf32>
    %224 = arith.mulf %223, %213 : vector<2x256xf32>
    %cst_81 = arith.constant 0.254829586 : f32
    %225 = vector.broadcast %cst_81 : f32 to vector<2x256xf32>
    %226 = arith.addf %224, %225 : vector<2x256xf32>
    %227 = arith.mulf %226, %213 : vector<2x256xf32>
    %cst_82 = arith.constant 0.000000e+00 : f32
    %228 = vector.broadcast %cst_82 : f32 to vector<2x256xf32>
    %229 = arith.subf %228, %207 : vector<2x256xf32>
    %230 = arith.mulf %229, %207 : vector<2x256xf32>
    %231 = math.exp %230 : vector<2x256xf32>
    %232 = arith.mulf %227, %231 : vector<2x256xf32>
    %cst_83 = arith.constant 1.000000e+00 : f32
    %233 = vector.broadcast %cst_83 : f32 to vector<2x256xf32>
    %234 = arith.subf %233, %232 : vector<2x256xf32>
    %cst_84 = arith.constant 0.000000e+00 : f32
    %235 = vector.broadcast %cst_84 : f32 to vector<2x256xf32>
    %236 = arith.cmpf oge, %206, %235 : vector<2x256xf32>
    %cst_85 = arith.constant 0.000000e+00 : f32
    %237 = vector.broadcast %cst_85 : f32 to vector<2x256xf32>
    %238 = arith.subf %237, %234 : vector<2x256xf32>
    %239 = arith.select %236, %234, %238 : vector<2x256xi1>, vector<2x256xf32>
    %cst_86 = arith.constant 1.000000e+00 : f32
    %240 = vector.broadcast %cst_86 : f32 to vector<2x256xf32>
    %241 = arith.addf %240, %239 : vector<2x256xf32>
    %242 = arith.mulf %204, %241 : vector<2x256xf32>
    %243 = arith.truncf %242 : vector<2x256xf32> to vector<2x256xbf16>
    %c0_87 = arith.constant 0 : index
    %c0_88 = arith.constant 0 : index
    %244 = vector.load %arg8[%c0_87, %c0_88] : memref<256x10xbf16, #tpu.memory_space<vmem>>, vector<256x10xbf16>
    %cst_89 = arith.constant dense<0.000000e+00> : vector<2x10xf32>
    %245 = tpu.matmul %243, %244, %cst_89 {dimension_numbers = #tpu.dot_dimension_numbers<[1], [0], [0], [1], [0, 0, 1, 1], [], []>} : vector<2x256xbf16>, vector<256x10xbf16>, vector<2x10xf32> -> vector<2x10xf32>
    %c1_90 = arith.constant 1 : index
    %c0_91 = arith.constant 0 : index
    %246 = vector.load %arg9[%c1_90, %c0_91] : memref<2x256xf32, #tpu.memory_space<vmem>>, vector<1x10xf32>
    %247 = vector.broadcast %246 : vector<1x10xf32> to vector<2x10xf32>
    %248 = arith.addf %245, %247 : vector<2x10xf32>
    %c0_92 = arith.constant 0 : index
    %c0_93 = arith.constant 0 : index
    %249 = vector.load %arg10[%c0_92, %c0_93] : memref<2x10xf32, #tpu.memory_space<vmem>>, vector<2x10xf32>
    tpu.vector_store %arg10[%c0_92, %c0_93], %248 {strides = array<i32>} : memref<2x10xf32, #tpu.memory_space<vmem>>, vector<2x10xf32>,
    return
  }
  func.func @transform_0(%arg0: i32) -> (i32, i32) {
    %c0_i32 = arith.constant 0 : i32
    %c0_i32_0 = arith.constant 0 : i32
    %c0_i32_1 = arith.constant 0 : i32
    return %c0_i32, %c0_i32_0 : i32, i32
  }
  func.func @transform_1(%arg0: i32) -> (i32, i32) {
    %c0_i32 = arith.constant 0 : i32
    %c0_i32_0 = arith.constant 0 : i32
    %c0_i32_1 = arith.constant 0 : i32
    return %c0_i32, %c0_i32_0 : i32, i32
  }
  func.func @transform_2(%arg0: i32) -> (i32, i32) {
    %c0_i32 = arith.constant 0 : i32
    %c0_i32_0 = arith.constant 0 : i32
    %c0_i32_1 = arith.constant 0 : i32
    return %c0_i32, %c0_i32_0 : i32, i32
  }
  func.func @transform_3(%arg0: i32) -> (i32, i32, i32) {
    %c0_i32 = arith.constant 0 : i32
    %c0_i32_0 = arith.constant 0 : i32
    %c0_i32_1 = arith.constant 0 : i32
    return %arg0, %c0_i32, %c0_i32_0 : i32, i32, i32
  }
  func.func @transform_4(%arg0: i32) -> (i32, i32, i32) {
    %c0_i32 = arith.constant 0 : i32
    %c0_i32_0 = arith.constant 0 : i32
    %c0_i32_1 = arith.constant 0 : i32
    return %arg0, %c0_i32, %c0_i32_0 : i32, i32, i32
  }
  func.func @transform_5(%arg0: i32) -> (i32, i32, i32) {
    %c0_i32 = arith.constant 0 : i32
    %c0_i32_0 = arith.constant 0 : i32
    %c0_i32_1 = arith.constant 0 : i32
    return %arg0, %c0_i32, %c0_i32_0 : i32, i32, i32
  }
  func.func @transform_6(%arg0: i32) -> (i32, i32) {
    %c0_i32 = arith.constant 0 : i32
    %c0_i32_0 = arith.constant 0 : i32
    %c0_i32_1 = arith.constant 0 : i32
    return %c0_i32, %c0_i32_0 : i32, i32
  }
  func.func @transform_7(%arg0: i32) -> (i32, i32) {
    %c0_i32 = arith.constant 0 : i32
    %c0_i32_0 = arith.constant 0 : i32
    %c0_i32_1 = arith.constant 0 : i32
    return %c0_i32, %c0_i32_0 : i32, i32
  }
  func.func @transform_8(%arg0: i32) -> (i32, i32) {
    %c0_i32 = arith.constant 0 : i32
    %c0_i32_0 = arith.constant 0 : i32
    %c0_i32_1 = arith.constant 0 : i32
    return %c0_i32, %c0_i32_0 : i32, i32
  }
  func.func @transform_9(%arg0: i32) -> (i32, i32) {
    %c0_i32 = arith.constant 0 : i32
    %c0_i32_0 = arith.constant 0 : i32
    %c0_i32_1 = arith.constant 0 : i32
    return %c0_i32, %c0_i32_0 : i32, i32
  }
}

</mosaic_0001>

<llo_original>
// kernel: vit_forward.1
$region0: #{vit_forward.1}
  #allocation0 [shape = 'u32[]', space=smem, size = 0x4, offset = 0x4, fixed_abs, tag = 'smem constant byte address 0x4 - core index']
  #allocation1 [shape = 'u32[144,128]{1,0:T(1,128)}', space=vmem, size = 0x12000, scoped, tag = 'internal scratch']
  #allocation2 [shape = 'f32[48,128]{1,0:T(8,128)}', space=vmem, size = 0x6000, scoped, tag = 'scratch operand']
  %s0 = inlined_call_operand.vmem [shape: f32[32,192], index: 0, kind: input, shape index: {}]
  %s1 = inlined_call_operand.vmem [shape: bf16[192,128], index: 1, kind: input, shape index: {}]
  %s2 = inlined_call_operand.vmem [shape: f32[32,128], index: 2, kind: input, shape index: {}]
  %s3 = inlined_call_operand.vmem [shape: bf16[2,128,640], index: 3, kind: input, shape index: {}]
  %s4 = inlined_call_operand.vmem [shape: bf16[2,384,128], index: 4, kind: input, shape index: {}]
  %s5 = inlined_call_operand.vmem [shape: f32[2,8,384], index: 5, kind: input, shape index: {}]
  %s6 = inlined_call_operand.vmem [shape: bf16[128,256], index: 6, kind: input, shape index: {}]
  %s7 = inlined_call_operand.vmem [shape: bf16[256,10], index: 7, kind: input, shape index: {}]
  %s8 = inlined_call_operand.vmem [shape: f32[2,256], index: 8, kind: input, shape index: {}]
  %s9 = inlined_call_operand.hbm [shape: f32[2,10], index: 9, kind: output, shape index: {}]
  %s10 = sld [smem:[#allocation0]]
  $region73: #{vit_forward.1} parent=0
    _
  %s12 = ssub.s32 1, %s10
  %s13 = scalar_select 0, %s12, %s10
  $region1: #{vit_forward.1} parent=0
    #allocation3 [shape = 'u8[1024]{0}', space=vmem, size = 0x400, scoped, tag = 'output window, operand 0, single buffered']
    #allocation4 [shape = 's32[2]{0}', space=sflag, size = 0x8, scoped, tag = 'scoped memory for vit_forward.1']
    %14 = vsyncpa [#allocation4], 0
    loop: start=0, step=1, limit=4
    $region2: #{vit_forward.1} parent=1 // loop_pre_header
      _
    $region3: #{vit_forward.1} parent=1 // loop_header
      %s16 = sphi 0, %s20
      %p17 = scmp.ge.s32.totalorder %s16, 4
      %s24 = sphi 0, %s24
      %s26 = sphi 0, %s24
      %s27 = sphi 0, %s26
      %s41 = sphi 0, %s27
      %s45 = sphi 0, %s45
      %s47 = sphi 0, %s45
      %s48 = sphi 0, %s47
      %s62 = sphi 0, %s48
      %s66 = sphi 0, %s66
      %s68 = sphi 0, %s66
      %s69 = sphi 0, %s68
      %s83 = sphi 0, %s69
      %s89 = sphi 0, %s91
      %s92 = sphi 0, %s89
      %s93 = sphi 0, %s92
      %s109 = sphi 0, %s93
      %s115 = sphi 0, %s117
      %s118 = sphi 0, %s115
      %s119 = sphi 0, %s118
      %s135 = sphi 0, %s119
      %s141 = sphi 0, %s143
      %s144 = sphi 0, %s141
      %s145 = sphi 0, %s144
      %s161 = sphi 0, %s145
      %s165 = sphi 0, %s165
      %s167 = sphi 0, %s165
      %s168 = sphi 0, %s167
      %s182 = sphi 0, %s168
      %s186 = sphi 0, %s186
      %s188 = sphi 0, %s186
      %s189 = sphi 0, %s188
      %s203 = sphi 0, %s189
      %s207 = sphi 0, %s207
      %s209 = sphi 0, %s207
      %s210 = sphi 0, %s209
      %s224 = sphi 0, %s210
      %s228 = sphi 0, %s228
      %s230 = sphi 0, %s228
      %s231 = sphi 0, %s230
      %s245 = sphi 0, %s231
    $region4: #{vit_forward.1} parent=1 // loop_header_branch
      %19 = sbr.rel (%p17) target = $region8
    $region5: #{vit_forward.1} parent=1 // loop_body
      %s21 = ssub.s32 %s16, 1
      %s22 = ssub.s32 %s16, 2
      %s23 = sadd.s32 %s16, 1
      %s25 = sadd.s32 %s24, 1
      %p28 = scmp.eq.s32.totalorder %s16, 1
      %p29 = scmp.ne.s32.totalorder %s24, %s26
      %p30 = scmp.eq.s32.totalorder %s16, 0
      %p31 = por %p29, %p30
      %p32 = scmp.ne.s32.totalorder %s24, %s26
      %p33 = scmp.eq.s32.totalorder %s21, 1
      %p34 = por %p32, %p33
      %p35 = scmp.ne.s32.totalorder %s26, %s27
      %p36 = scmp.eq.s32.totalorder %s21, 0
      %p37 = por %p35, %p36
      %p38 = scmp.ne.s32.totalorder %s26, %s27
      %p39 = scmp.eq.s32.totalorder %s22, 1
      %p40 = por %p38, %p39
      %p42 = scmp.ne.s32.totalorder %s27, %s41
      %p43 = scmp.eq.s32.totalorder %s22, 0
      %p44 = por %p42, %p43
      %s46 = sadd.s32 %s45, 1
      %p49 = scmp.eq.s32.totalorder %s16, 1
      %p50 = scmp.ne.s32.totalorder %s45, %s47
      %p51 = scmp.eq.s32.totalorder %s16, 0
      %p52 = por %p50, %p51
      %p53 = scmp.ne.s32.totalorder %s45, %s47
      %p54 = scmp.eq.s32.totalorder %s21, 1
      %p55 = por %p53, %p54
      %p56 = scmp.ne.s32.totalorder %s47, %s48
      %p57 = scmp.eq.s32.totalorder %s21, 0
      %p58 = por %p56, %p57
      %p59 = scmp.ne.s32.totalorder %s47, %s48
      %p60 = scmp.eq.s32.totalorder %s22, 1
      %p61 = por %p59, %p60
      %p63 = scmp.ne.s32.totalorder %s48, %s62
      %p64 = scmp.eq.s32.totalorder %s22, 0
      %p65 = por %p63, %p64
      %s67 = sadd.s32 %s66, 1
      %p70 = scmp.eq.s32.totalorder %s16, 1
      %p71 = scmp.ne.s32.totalorder %s66, %s68
      %p72 = scmp.eq.s32.totalorder %s16, 0
      %p73 = por %p71, %p72
      %p74 = scmp.ne.s32.totalorder %s66, %s68
      %p75 = scmp.eq.s32.totalorder %s21, 1
      %p76 = por %p74, %p75
      %p77 = scmp.ne.s32.totalorder %s68, %s69
      %p78 = scmp.eq.s32.totalorder %s21, 0
      %p79 = por %p77, %p78
      %p80 = scmp.ne.s32.totalorder %s68, %s69
      %p81 = scmp.eq.s32.totalorder %s22, 1
      %p82 = por %p80, %p81
      %p84 = scmp.ne.s32.totalorder %s69, %s83
      %p85 = scmp.eq.s32.totalorder %s22, 0
      %p86 = por %p84, %p85
      %s87 = ssub.s32 %s16, %s23
      %p88 = scmp.eq.s32.totalorder %s87, 0
      %s90 = sadd.s32 %s89, 1
      %s91 = scalar_select %p88, %s89, %s90
      %p94 = pneg %p88
      %p95 = scmp.eq.s32.totalorder %s16, 1
      %p96 = por %p94, %p95
      %p97 = scmp.ne.s32.totalorder %s89, %s92
      %p98 = scmp.eq.s32.totalorder %s16, 0
      %p99 = por %p97, %p98
      %p100 = scmp.ne.s32.totalorder %s89, %s92
      %p101 = scmp.eq.s32.totalorder %s21, 1
      %p102 = por %p100, %p101
      %p103 = scmp.ne.s32.totalorder %s92, %s93
      %p104 = scmp.eq.s32.totalorder %s21, 0
      %p105 = por %p103, %p104
      %p106 = scmp.ne.s32.totalorder %s92, %s93
      %p107 = scmp.eq.s32.totalorder %s22, 1
      %p108 = por %p106, %p107
      %p110 = scmp.ne.s32.totalorder %s93, %s109
      %p111 = scmp.eq.s32.totalorder %s22, 0
      %p112 = por %p110, %p111
      %s113 = ssub.s32 %s16, %s23
      %p114 = scmp.eq.s32.totalorder %s113, 0
      %s116 = sadd.s32 %s115, 1
      %s117 = scalar_select %p114, %s115, %s116
      %p120 = pneg %p114
      %p121 = scmp.eq.s32.totalorder %s16, 1
      %p122 = por %p120, %p121
      %p123 = scmp.ne.s32.totalorder %s115, %s118
      %p124 = scmp.eq.s32.totalorder %s16, 0
      %p125 = por %p123, %p124
      %p126 = scmp.ne.s32.totalorder %s115, %s118
      %p127 = scmp.eq.s32.totalorder %s21, 1
      %p128 = por %p126, %p127
      %p129 = scmp.ne.s32.totalorder %s118, %s119
      %p130 = scmp.eq.s32.totalorder %s21, 0
      %p131 = por %p129, %p130
      %p132 = scmp.ne.s32.totalorder %s118, %s119
      %p133 = scmp.eq.s32.totalorder %s22, 1
      %p134 = por %p132, %p133
      %p136 = scmp.ne.s32.totalorder %s119, %s135
      %p137 = scmp.eq.s32.totalorder %s22, 0
      %p138 = por %p136, %p137
      %s139 = ssub.s32 %s16, %s23
      %p140 = scmp.eq.s32.totalorder %s139, 0
      %s142 = sadd.s32 %s141, 1
      %s143 = scalar_select %p140, %s141, %s142
      %p146 = pneg %p140
      %p147 = scmp.eq.s32.totalorder %s16, 1
      %p148 = por %p146, %p147
      %p149 = scmp.ne.s32.totalorder %s141, %s144
      %p150 = scmp.eq.s32.totalorder %s16, 0
      %p151 = por %p149, %p150
      %p152 = scmp.ne.s32.totalorder %s141, %s144
      %p153 = scmp.eq.s32.totalorder %s21, 1
      %p154 = por %p152, %p153
      %p155 = scmp.ne.s32.totalorder %s144, %s145
      %p156 = scmp.eq.s32.totalorder %s21, 0
      %p157 = por %p155, %p156
      %p158 = scmp.ne.s32.totalorder %s144, %s145
      %p159 = scmp.eq.s32.totalorder %s22, 1
      %p160 = por %p158, %p159
      %p162 = scmp.ne.s32.totalorder %s145, %s161
      %p163 = scmp.eq.s32.totalorder %s22, 0
      %p164 = por %p162, %p163
      %s166 = sadd.s32 %s165, 1
      %p169 = scmp.eq.s32.totalorder %s16, 1
      %p170 = scmp.ne.s32.totalorder %s165, %s167
      %p171 = scmp.eq.s32.totalorder %s16, 0
      %p172 = por %p170, %p171
      %p173 = scmp.ne.s32.totalorder %s165, %s167
      %p174 = scmp.eq.s32.totalorder %s21, 1
      %p175 = por %p173, %p174
      %p176 = scmp.ne.s32.totalorder %s167, %s168
      %p177 = scmp.eq.s32.totalorder %s21, 0
      %p178 = por %p176, %p177
      %p179 = scmp.ne.s32.totalorder %s167, %s168
      %p180 = scmp.eq.s32.totalorder %s22, 1
      %p181 = por %p179, %p180
      %p183 = scmp.ne.s32.totalorder %s168, %s182
      %p184 = scmp.eq.s32.totalorder %s22, 0
      %p185 = por %p183, %p184
      %s187 = sadd.s32 %s186, 1
      %p190 = scmp.eq.s32.totalorder %s16, 1
      %p191 = scmp.ne.s32.totalorder %s186, %s188
      %p192 = scmp.eq.s32.totalorder %s16, 0
      %p193 = por %p191, %p192
      %p194 = scmp.ne.s32.totalorder %s186, %s188
      %p195 = scmp.eq.s32.totalorder %s21, 1
      %p196 = por %p194, %p195
      %p197 = scmp.ne.s32.totalorder %s188, %s189
      %p198 = scmp.eq.s32.totalorder %s21, 0
      %p199 = por %p197, %p198
      %p200 = scmp.ne.s32.totalorder %s188, %s189
      %p201 = scmp.eq.s32.totalorder %s22, 1
      %p202 = por %p200, %p201
      %p204 = scmp.ne.s32.totalorder %s189, %s203
      %p205 = scmp.eq.s32.totalorder %s22, 0
      %p206 = por %p204, %p205
      %s208 = sadd.s32 %s207, 1
      %p211 = scmp.eq.s32.totalorder %s16, 1
      %p212 = scmp.ne.s32.totalorder %s207, %s209
      %p213 = scmp.eq.s32.totalorder %s16, 0
      %p214 = por %p212, %p213
      %p215 = scmp.ne.s32.totalorder %s207, %s209
      %p216 = scmp.eq.s32.totalorder %s21, 1
      %p217 = por %p215, %p216
      %p218 = scmp.ne.s32.totalorder %s209, %s210
      %p219 = scmp.eq.s32.totalorder %s21, 0
      %p220 = por %p218, %p219
      %p221 = scmp.ne.s32.totalorder %s209, %s210
      %p222 = scmp.eq.s32.totalorder %s22, 1
      %p223 = por %p221, %p222
      %p225 = scmp.ne.s32.totalorder %s210, %s224
      %p226 = scmp.eq.s32.totalorder %s22, 0
      %p227 = por %p225, %p226
      %s229 = sadd.s32 %s228, 1
      %p232 = scmp.eq.s32.totalorder %s16, 1
      %p233 = scmp.ne.s32.totalorder %s228, %s230
      %p234 = scmp.eq.s32.totalorder %s16, 0
      %p235 = por %p233, %p234
      %p236 = scmp.ne.s32.totalorder %s228, %s230
      %p237 = scmp.eq.s32.totalorder %s21, 1
      %p238 = por %p236, %p237
      %p239 = scmp.ne.s32.totalorder %s230, %s231
      %p240 = scmp.eq.s32.totalorder %s21, 0
      %p241 = por %p239, %p240
      %p242 = scmp.ne.s32.totalorder %s230, %s231
      %p243 = scmp.eq.s32.totalorder %s22, 1
      %p244 = por %p242, %p243
      %p246 = scmp.ne.s32.totalorder %s231, %s245
      %p247 = scmp.eq.s32.totalorder %s22, 0
      %p248 = por %p246, %p247
      %p249 = scmp.le.s32.totalorder 1, %s16
      %p250 = scmp.lt.s32.totalorder %s16, 3
      %p251 = pnand %p249, %p250
      %p252 = pneg %p251
      // Predicated region
      $region9: #{vit_forward.1} parent=5 // pred_check
        _
      $region10: #{vit_forward.1} parent=5 // pred_check_branch
        %254 = sbr.rel (%p251) target = $region12
      $region11: #{vit_forward.1} parent=5 // pred_region
        %s255 = ssub.s32 %s16, 1
        // Predicated region
        $region13: #{vit_forward.1} parent=11 // pred_check
          %p256 = pneg %p37
        $region14: #{vit_forward.1} parent=11 // pred_check_branch
          %258 = sbr.rel (%p256) target = $region16
        $region15: #{vit_forward.1} parent=11 // pred_region
          _
        $region16: #{vit_forward.1} parent=11 // pred_fallthru
          _
        // Predicated region
        $region17: #{vit_forward.1} parent=11 // pred_check
          %p259 = pneg %p58
        $region18: #{vit_forward.1} parent=11 // pred_check_branch
          %261 = sbr.rel (%p259) target = $region20
        $region19: #{vit_forward.1} parent=11 // pred_region
          _
        $region20: #{vit_forward.1} parent=11 // pred_fallthru
          _
        // Predicated region
        $region21: #{vit_forward.1} parent=11 // pred_check
          %p262 = pneg %p79
        $region22: #{vit_forward.1} parent=11 // pred_check_branch
          %264 = sbr.rel (%p262) target = $region24
        $region23: #{vit_forward.1} parent=11 // pred_region
          _
        $region24: #{vit_forward.1} parent=11 // pred_fallthru
          _
        // Predicated region
        $region25: #{vit_forward.1} parent=11 // pred_check
          %p265 = pneg %p178
        $region26: #{vit_forward.1} parent=11 // pred_check_branch
          %267 = sbr.rel (%p265) target = $region28
        $region27: #{vit_forward.1} parent=11 // pred_region
          _
        $region28: #{vit_forward.1} parent=11 // pred_fallthru
          _
        // Predicated region
        $region29: #{vit_forward.1} parent=11 // pred_check
          %p268 = pneg %p199
        $region30: #{vit_forward.1} parent=11 // pred_check_branch
          %270 = sbr.rel (%p268) target = $region32
        $region31: #{vit_forward.1} parent=11 // pred_region
          _
        $region32: #{vit_forward.1} parent=11 // pred_fallthru
          _
        // Predicated region
        $region33: #{vit_forward.1} parent=11 // pred_check
          %p271 = pneg %p220
        $region34: #{vit_forward.1} parent=11 // pred_check_branch
          %273 = sbr.rel (%p271) target = $region36
        $region35: #{vit_forward.1} parent=11 // pred_region
          _
        $region36: #{vit_forward.1} parent=11 // pred_fallthru
          _
      $region12: #{vit_forward.1} parent=5 // pred_fallthru
        _
      %p274 = scmp.lt.s32.totalorder %s16, 2
      // Predicated region
      $region37: #{vit_forward.1} parent=5 // pred_check
        %p275 = pneg %p274
      $region38: #{vit_forward.1} parent=5 // pred_check_branch
        %277 = sbr.rel (%p275) target = $region40
      $region39: #{vit_forward.1} parent=5 // pred_region
        // Predicated region
        $region41: #{vit_forward.1} parent=39 // pred_check
          %p278 = pneg %p99
        $region42: #{vit_forward.1} parent=39 // pred_check_branch
          %280 = sbr.rel (%p278) target = $region44
        $region43: #{vit_forward.1} parent=39 // pred_region
          %p281 = scmp.lt.s32.totalorder %s16, 1
          %s282 = scalar_select %p281, %s16, 1
          %s283 = smul.addr %s282, 80
          %s284 = smul.addr %s283, 4
          %s285 = scalar_lea.vmem %s3, %s284
        $region44: #{vit_forward.1} parent=39 // pred_fallthru
          _
        // Predicated region
        $region45: #{vit_forward.1} parent=39 // pred_check
          %p286 = pneg %p125
        $region46: #{vit_forward.1} parent=39 // pred_check_branch
          %288 = sbr.rel (%p286) target = $region48
        $region47: #{vit_forward.1} parent=39 // pred_region
          %p289 = scmp.lt.s32.totalorder %s16, 1
          %s290 = scalar_select %p289, %s16, 1
          %s291 = smul.addr %s290, 48
          %s292 = smul.addr %s291, 4
          %s293 = scalar_lea.vmem %s4, %s292
        $region48: #{vit_forward.1} parent=39 // pred_fallthru
          _
        // Predicated region
        $region49: #{vit_forward.1} parent=39 // pred_check
          %p294 = pneg %p151
        $region50: #{vit_forward.1} parent=39 // pred_check_branch
          %296 = sbr.rel (%p294) target = $region52
        $region51: #{vit_forward.1} parent=39 // pred_region
          %p297 = scmp.lt.s32.totalorder %s16, 1
          %s298 = scalar_select %p297, %s16, 1
          %s299 = smul.addr %s298, 3
          %s300 = smul.addr %s299, 8
          %s301 = scalar_lea.vmem %s5, %s300
        $region52: #{vit_forward.1} parent=39 // pred_fallthru
          _
      $region40: #{vit_forward.1} parent=5 // pred_fallthru
        _
      %p302 = scmp.le.s32.totalorder 1, %s16
      %p303 = scmp.lt.s32.totalorder %s16, 3
      %p304 = pnand %p302, %p303
      %p305 = pneg %p304
      // Predicated region
      $region53: #{vit_forward.1} parent=5 // pred_check
        _
      $region54: #{vit_forward.1} parent=5 // pred_check_branch
        %307 = sbr.rel (%p304) target = $region56
      $region55: #{vit_forward.1} parent=5 // pred_region
        %s308 = ssub.s32 %s16, 1
        %p309 = pneg %p37
        %p310 = pneg %p34
        %p311 = pneg %p58
        %p312 = pneg %p55
        %p313 = pneg %p79
        %p314 = pneg %p76
        %p315 = scmp.lt.s32.totalorder %s21, 1
        %s316 = scalar_select %p315, %s21, 1
        %s317 = smul.addr %s316, 80
        %s318 = smul.addr %s317, 4
        %s319 = scalar_lea.vmem %s3, %s318
        %p320 = pneg %p105
        %p321 = pneg %p102
        %p322 = scmp.lt.s32.totalorder %s21, 1
        %s323 = scalar_select %p322, %s21, 1
        %s324 = smul.addr %s323, 48
        %s325 = smul.addr %s324, 4
        %s326 = scalar_lea.vmem %s4, %s325
        %p327 = pneg %p131
        %p328 = pneg %p128
        %p329 = scmp.lt.s32.totalorder %s21, 1
        %s330 = scalar_select %p329, %s21, 1
        %s331 = smul.addr %s330, 3
        %s332 = smul.addr %s331, 8
        %s333 = scalar_lea.vmem %s5, %s332
        %p334 = pneg %p157
        %p335 = pneg %p154
        %p336 = pneg %p178
        %p337 = pneg %p175
        %p338 = pneg %p199
        %p339 = pneg %p196
        %p340 = pneg %p220
        %p341 = pneg %p217
        %p342 = pneg %p241
        %p343 = pneg %p238
        %p344 = scmp.lt.s32.totalorder %s21, 1
        %s345 = scalar_select %p344, %s21, 1
        %s346 = smul.addr %s345, 80
        %s347 = smul.addr %s346, 4
        %s348 = scalar_lea.vmem %s3, %s347
        %p349 = scmp.lt.s32.totalorder %s21, 1
        %s350 = scalar_select %p349, %s21, 1
        %s351 = smul.addr %s350, 48
        %s352 = smul.addr %s351, 4
        %s353 = scalar_lea.vmem %s4, %s352
        %p354 = scmp.lt.s32.totalorder %s21, 1
        %s355 = scalar_select %p354, %s21, 1
        %s356 = smul.addr %s355, 3
        %s357 = smul.addr %s356, 8
        %s358 = scalar_lea.vmem %s5, %s357
        %v360 = vld [vmem:[%s0] sm:$0xff]
        %v361 = vld [vmem:[%s0 + $0x8] sm:$0xff]
        %v362 = vld [vmem:[%s0 + $0x10] sm:$0xff]
        %v363 = vld [vmem:[%s0 + $0x18] sm:$0xff]
        %v364 = vld [vmem:[%s0 + $0x20] sm:$0xff]
        %v365 = vld [vmem:[%s0 + $0x28] sm:$0xff]
        %v366 = vld [vmem:[%s0 + $0x30] sm:$0xff]
        %v367 = vld [vmem:[%s0 + $0x38] sm:$0xff]
        %v368 = vpack.c.bf16 %v362, %v360
        %v369 = vpack.c.bf16 %v363, %v361
        %v370 = vpack.c.bf16 %v366, %v364
        %v371 = vpack.c.bf16 %v367, %v365
        %v372 = vld [vmem:[%s1] sm:$0xf]
        %v373 = vld [vmem:[%s1 + $0x4] sm:$0xf]
        %v374 = vld [vmem:[%s1 + $0x8] sm:$0xf]
        %v375 = vld [vmem:[%s1 + $0xc] sm:$0xf]
        %v376 = vld [vmem:[%s1 + $0x10] sm:$0xf]
        %v377 = vld [vmem:[%s1 + $0x14] sm:$0xf]
        %v378 = vld [vmem:[%s1 + $0x18] sm:$0xf]
        %v379 = vld [vmem:[%s1 + $0x1c] sm:$0xf]
        %v380 = vld [vmem:[%s1 + $0x20] sm:$0xf]
        %v381 = vld [vmem:[%s1 + $0x24] sm:$0xf]
        %v382 = vld [vmem:[%s1 + $0x28] sm:$0xf]
        %v383 = vld [vmem:[%s1 + $0x2c] sm:$0xf]
        %v384 = vld [vmem:[%s1 + $0x30] sm:$0xf]
        %v385 = vld [vmem:[%s1 + $0x34] sm:$0xf]
        %v386 = vld [vmem:[%s1 + $0x38] sm:$0xf]
        %v387 = vld [vmem:[%s1 + $0x3c] sm:$0xf]
        %v388 = vld [vmem:[%s1 + $0x40] sm:$0xf]
        %v389 = vld [vmem:[%s1 + $0x44] sm:$0xf]
        %v390 = vld [vmem:[%s1 + $0x48] sm:$0xf]
        %v391 = vld [vmem:[%s1 + $0x4c] sm:$0xf]
        %v392 = vld [vmem:[%s1 + $0x50] sm:$0xf]
        %v393 = vld [vmem:[%s1 + $0x54] sm:$0xf]
        %v394 = vld [vmem:[%s1 + $0x58] sm:$0xf]
        %v395 = vld [vmem:[%s1 + $0x5c] sm:$0xf]
        %v396 = vld [vmem:[%s2] sm:$0x1]
        %v397 = vlaneseq
        %v398 = vshrl.u32 %v397, 7
        %v399 = vsub.s32 0, %v398
        %v400 = vrot.slane %v396, %v399
        %v425 = vunpack.c.l.b16 %v372
        %v426 = vunpack.c.l.b16 %v373
        %v427 = vunpack.c.l.b16 %v374
        %v428 = vunpack.c.l.b16 %v375
        %v429 = vunpack.c.l.b16 %v376
        %v430 = vunpack.c.l.b16 %v377
        %v431 = vunpack.c.l.b16 %v378
        %v432 = vunpack.c.l.b16 %v379
        %v433 = vunpack.c.l.b16 %v380
        %v434 = vunpack.c.l.b16 %v381
        %v435 = vunpack.c.l.b16 %v382
        %v436 = vunpack.c.l.b16 %v383
        %v437 = vunpack.c.l.b16 %v384
        %v438 = vunpack.c.l.b16 %v385
        %v439 = vunpack.c.l.b16 %v386
        %v440 = vunpack.c.l.b16 %v387
        %v441 = vunpack.c.l.b16 %v388
        %v442 = vunpack.c.l.b16 %v389
        %v443 = vunpack.c.l.b16 %v390
        %v444 = vunpack.c.l.b16 %v391
        %v445 = vunpack.c.l.b16 %v392
        %v446 = vunpack.c.l.b16 %v393
        %v447 = vunpack.c.l.b16 %v394
        %v448 = vunpack.c.l.b16 %v395
        %v449 = vpack.c.b16 %v426, %v425
        %v450 = vpack.c.b16 %v428, %v427
        %v451 = vpack.c.b16 %v430, %v429
        %v452 = vpack.c.b16 %v432, %v431
        %v453 = vpack.c.b16 %v434, %v433
        %v454 = vpack.c.b16 %v436, %v435
        %v455 = vpack.c.b16 %v438, %v437
        %v456 = vpack.c.b16 %v440, %v439
        %v457 = vpack.c.b16 %v442, %v441
        %v458 = vpack.c.b16 %v444, %v443
        %v459 = vpack.c.b16 %v446, %v445
        %v460 = vpack.c.b16 %v448, %v447
        %vm473 = vcmask 523264
        %v475 = vsel %vm473, %v369, 0
        %v478 = vsel %vm473, %v371, 0
        %480 = vmatprep.subr.bf16.mxu0 0
        %481 = vmatpush1.bf16.msra.mxu0 %v456
        %482 = vmatprep.subr.bf16.mxu0 0
        %483 = vmatpush1.bf16.msra.mxu0 %v455
        %484 = vmatprep.subr.bf16.mxu0 0
        %485 = vmatpush1.bf16.msra.mxu0 %v454
        %486 = vmatprep.subr.bf16.mxu0 0
        %487 = vmatpush1.bf16.msra.mxu0 %v453
        %488 = vmatprep.subr.bf16.mxu0 0
        %489 = vmatpush1.bf16.msra.mxu0 %v452
        %490 = vmatprep.subr.bf16.mxu0 0
        %491 = vmatpush1.bf16.msra.mxu0 %v451
        %492 = vmatprep.subr.bf16.mxu0 0
        %493 = vmatpush1.bf16.msra.mxu0 %v450
        %494 = vmatprep.subr.bf16.mxu0 0
        %495 = vmatpush1.bf16.msra.mxu0 %v449
        %496 = vmatprep.subr.bf16.mxu0 0
        %497 = vmatpush2.bf16.msra.mxu0 0
        %498 = vmatprep.subr.bf16.mxu0 0
        %499 = vmatpush2.bf16.msra.mxu0 0
        %500 = vmatprep.subr.bf16.mxu0 0
        %501 = vmatpush2.bf16.msra.mxu0 0
        %502 = vmatprep.subr.bf16.mxu0 0
        %503 = vmatpush2.bf16.msra.mxu0 0
        %504 = vmatprep.subr.bf16.mxu0 0
        %505 = vmatpush2.bf16.msra.mxu0 %v460
        %506 = vmatprep.subr.bf16.mxu0 0
        %507 = vmatpush2.bf16.msra.mxu0 %v459
        %508 = vmatprep.subr.bf16.mxu0 0
        %509 = vmatpush2.bf16.msra.mxu0 %v458
        %510 = vmatprep.subr.bf16.mxu0 0
        %511 = vmatpush2.bf16.msra.mxu0 %v457
        %512 = vmatprep.mubr.bf16.mxu0 %v475
        %513 = vmatmul.mubr.bf16.gmra.mxu0 %v368
        %v514 = vpop.f32.mrf.mxu0
        %v515 = vadd.f32 %v400, %v514
        %v516 = vpop.f32.mrf.mxu0
        %v517 = vpop.f32.mrf.mxu0
        %v518 = vadd.f32 %v400, %v517
        %v519 = vpop.f32.mrf.mxu0
        %520 = vmatprep.mubr.bf16.mxu0 %v478
        %521 = vmatmul.mubr.bf16.gmra.mxu0 %v370
        %v522 = vpop.f32.mrf.mxu0
        %v523 = vadd.f32 %v400, %v522
        %v524 = vpop.f32.mrf.mxu0
        %v525 = vpop.f32.mrf.mxu0
        %v526 = vadd.f32 %v400, %v525
        %v527 = vpop.f32.mrf.mxu0
        %528 = vdwg.mxu0
        %v529 = vld [vmem:[%s2 + $0x8] sm:$0xff]
        %v530 = vld [vmem:[%s2 + $0x10] sm:$0xff]
        %v531 = vld [vmem:[%s2 + $0x18] sm:$0xff]
        %p532 = scmp.eq.s32.totalorder %s21, 0
        // Predicated region
        $region57: #{vit_forward.1} parent=55 // pred_check
          %p533 = pneg %p532
        $region58: #{vit_forward.1} parent=55 // pred_check_branch
          %535 = sbr.rel (%p533) target = $region60
        $region59: #{vit_forward.1} parent=55 // pred_region
          %v536 = vadd.f32 %v515, %v529
          %v537 = vadd.f32 %v518, %v530
          %538 = vst [vmem:[#allocation2] sm:$0xff] %v536
          %539 = vst [vmem:[#allocation2 + $0x8] sm:$0xff] %v537
          %540 = vst [vmem:[#allocation2 + $0x10] sm:$0xff] %v531
          %v541 = vadd.f32 %v523, %v529
          %v542 = vadd.f32 %v526, %v530
          %543 = vst [vmem:[#allocation2 + $0x18] sm:$0xff] %v541
          %544 = vst [vmem:[#allocation2 + $0x20] sm:$0xff] %v542
          %545 = vst [vmem:[#allocation2 + $0x28] sm:$0xff] %v531
        $region60: #{vit_forward.1} parent=55 // pred_fallthru
          _
        %v546 = vld [vmem:[#allocation2] sm:$0xff]
        %v547 = vld [vmem:[#allocation2 + $0x8] sm:$0xff]
        %v548 = vld [vmem:[#allocation2 + $0x10] sm:$0xff]
        %v549 = vld [vmem:[#allocation2 + $0x18] sm:$0xff]
        %v550 = vld [vmem:[#allocation2 + $0x20] sm:$0xff]
        %v551 = vld [vmem:[#allocation2 + $0x28] sm:$0xff]
        %v552 = vpack.c.bf16 %v547, %v546
        %v553 = vpack.c.bf16 %v549, %v548
        %v554 = vpack.c.bf16 %v551, %v550
        %v555 = vld [vmem:[%s348] sm:$0xff]
        %v556 = vld [vmem:[%s348 + $0x8] sm:$0xf]
        %v557 = vld [vmem:[%s348 + $0x14] sm:$0xff]
        %v558 = vld [vmem:[%s348 + $0x1c] sm:$0xf]
        %v559 = vld [vmem:[%s348 + $0x28] sm:$0xff]
        %v560 = vld [vmem:[%s348 + $0x30] sm:$0xf]
        %v561 = vld [vmem:[%s348 + $0x3c] sm:$0xff]
        %v562 = vld [vmem:[%s348 + $0x44] sm:$0xf]
        %v563 = vld [vmem:[%s348 + $0x50] sm:$0xff]
        %v564 = vld [vmem:[%s348 + $0x58] sm:$0xf]
        %v565 = vld [vmem:[%s348 + $0x64] sm:$0xff]
        %v566 = vld [vmem:[%s348 + $0x6c] sm:$0xf]
        %v567 = vld [vmem:[%s348 + $0x78] sm:$0xff]
        %v568 = vld [vmem:[%s348 + $0x80] sm:$0xf]
        %v569 = vld [vmem:[%s348 + $0x8c] sm:$0xff]
        %v570 = vld [vmem:[%s348 + $0x94] sm:$0xf]
        %v571 = vld [vmem:[%s348 + $0xa0] sm:$0xff]
        %v572 = vld [vmem:[%s348 + $0xa8] sm:$0xf]
        %v573 = vld [vmem:[%s348 + $0xb4] sm:$0xff]
        %v574 = vld [vmem:[%s348 + $0xbc] sm:$0xf]
        %v575 = vld [vmem:[%s348 + $0xc8] sm:$0xff]
        %v576 = vld [vmem:[%s348 + $0xd0] sm:$0xf]
        %v577 = vld [vmem:[%s348 + $0xdc] sm:$0xff]
        %v578 = vld [vmem:[%s348 + $0xe4] sm:$0xf]
        %v579 = vld [vmem:[%s348 + $0xf0] sm:$0xff]
        %v580 = vld [vmem:[%s348 + $0xf8] sm:$0xf]
        %v581 = vld [vmem:[%s348 + $0x104] sm:$0xff]
        %v582 = vld [vmem:[%s348 + $0x10c] sm:$0xf]
        %v583 = vld [vmem:[%s348 + $0x118] sm:$0xff]
        %v584 = vld [vmem:[%s348 + $0x120] sm:$0xf]
        %v585 = vld [vmem:[%s348 + $0x12c] sm:$0xff]
        %v586 = vld [vmem:[%s348 + $0x134] sm:$0xf]
        %v587 = vld [vmem:[%s348 + $0xc] sm:$0xff]
        %v588 = vld [vmem:[%s348 + $0x20] sm:$0xff]
        %v589 = vld [vmem:[%s348 + $0x34] sm:$0xff]
        %v590 = vld [vmem:[%s348 + $0x48] sm:$0xff]
        %v591 = vld [vmem:[%s348 + $0x5c] sm:$0xff]
        %v592 = vld [vmem:[%s348 + $0x70] sm:$0xff]
        %v593 = vld [vmem:[%s348 + $0x84] sm:$0xff]
        %v594 = vld [vmem:[%s348 + $0x98] sm:$0xff]
        %v595 = vld [vmem:[%s348 + $0xac] sm:$0xff]
        %v596 = vld [vmem:[%s348 + $0xc0] sm:$0xff]
        %v597 = vld [vmem:[%s348 + $0xd4] sm:$0xff]
        %v598 = vld [vmem:[%s348 + $0xe8] sm:$0xff]
        %v599 = vld [vmem:[%s348 + $0xfc] sm:$0xff]
        %v600 = vld [vmem:[%s348 + $0x110] sm:$0xff]
        %v601 = vld [vmem:[%s348 + $0x124] sm:$0xff]
        %v602 = vld [vmem:[%s348 + $0x138] sm:$0xff]
        %v603 = vld [vmem:[%s353] sm:$0xf]
        %v604 = vld [vmem:[%s353 + $0x4] sm:$0xf]
        %v605 = vld [vmem:[%s353 + $0x8] sm:$0xf]
        %v606 = vld [vmem:[%s353 + $0xc] sm:$0xf]
        %v607 = vld [vmem:[%s353 + $0x10] sm:$0xf]
        %v608 = vld [vmem:[%s353 + $0x14] sm:$0xf]
        %v609 = vld [vmem:[%s353 + $0x18] sm:$0xf]
        %v610 = vld [vmem:[%s353 + $0x1c] sm:$0xf]
        %v611 = vld [vmem:[%s353 + $0x20] sm:$0xf]
        %v612 = vld [vmem:[%s353 + $0x24] sm:$0xf]
        %v613 = vld [vmem:[%s353 + $0x28] sm:$0xf]
        %v614 = vld [vmem:[%s353 + $0x2c] sm:$0xf]
        %v615 = vld [vmem:[%s353 + $0x30] sm:$0xf]
        %v616 = vld [vmem:[%s353 + $0x34] sm:$0xf]
        %v617 = vld [vmem:[%s353 + $0x38] sm:$0xf]
        %v618 = vld [vmem:[%s353 + $0x3c] sm:$0xf]
        %v619 = vld [vmem:[%s353 + $0x40] sm:$0xf]
        %v620 = vld [vmem:[%s353 + $0x44] sm:$0xf]
        %v621 = vld [vmem:[%s353 + $0x48] sm:$0xf]
        %v622 = vld [vmem:[%s353 + $0x4c] sm:$0xf]
        %v623 = vld [vmem:[%s353 + $0x50] sm:$0xf]
        %v624 = vld [vmem:[%s353 + $0x54] sm:$0xf]
        %v625 = vld [vmem:[%s353 + $0x58] sm:$0xf]
        %v626 = vld [vmem:[%s353 + $0x5c] sm:$0xf]
        %v627 = vld [vmem:[%s353 + $0x60] sm:$0xf]
        %v628 = vld [vmem:[%s353 + $0x64] sm:$0xf]
        %v629 = vld [vmem:[%s353 + $0x68] sm:$0xf]
        %v630 = vld [vmem:[%s353 + $0x6c] sm:$0xf]
        %v631 = vld [vmem:[%s353 + $0x70] sm:$0xf]
        %v632 = vld [vmem:[%s353 + $0x74] sm:$0xf]
        %v633 = vld [vmem:[%s353 + $0x78] sm:$0xf]
        %v634 = vld [vmem:[%s353 + $0x7c] sm:$0xf]
        %v635 = vld [vmem:[%s353 + $0x80] sm:$0xf]
        %v636 = vld [vmem:[%s353 + $0x84] sm:$0xf]
        %v637 = vld [vmem:[%s353 + $0x88] sm:$0xf]
        %v638 = vld [vmem:[%s353 + $0x8c] sm:$0xf]
        %v639 = vld [vmem:[%s353 + $0x90] sm:$0xf]
        %v640 = vld [vmem:[%s353 + $0x94] sm:$0xf]
        %v641 = vld [vmem:[%s353 + $0x98] sm:$0xf]
        %v642 = vld [vmem:[%s353 + $0x9c] sm:$0xf]
        %v643 = vld [vmem:[%s353 + $0xa0] sm:$0xf]
        %v644 = vld [vmem:[%s353 + $0xa4] sm:$0xf]
        %v645 = vld [vmem:[%s353 + $0xa8] sm:$0xf]
        %v646 = vld [vmem:[%s353 + $0xac] sm:$0xf]
        %v647 = vld [vmem:[%s353 + $0xb0] sm:$0xf]
        %v648 = vld [vmem:[%s353 + $0xb4] sm:$0xf]
        %v649 = vld [vmem:[%s353 + $0xb8] sm:$0xf]
        %v650 = vld [vmem:[%s353 + $0xbc] sm:$0xf]
        %v651 = vlaneseq
        %v652 = vshrl.u32 %v651, 7
        %v653 = vadd.s32 %v652, 8
        %v654 = vadd.s32 %v652, 16
        %v655 = vadd.s32 %v652, 24
        %v656 = vadd.s32 %v652, 32
        %v657 = vadd.s32 %v652, 40
        %v658 = vadd.s32 %v652, 48
        %v659 = vadd.s32 %v652, 56
        %v660 = vadd.s32 %v652, 64
        %v661 = vadd.s32 %v652, 72
        %v662 = vadd.s32 %v652, 80
        %v663 = vadd.s32 %v652, 88
        %v664 = vadd.s32 %v652, 96
        %v665 = vadd.s32 %v652, 104
        %v666 = vadd.s32 %v652, 112
        %v667 = vadd.s32 %v652, 120
        %v668 = vlaneseq
        %v669 = vand.u32 %v668, 127
        %v670 = vmul.u32 %v669, 32
        %vm671 = vcmp.ge.s32.totalorder %v652, %v670
        %vm672 = vcmp.ge.s32.totalorder %v653, %v670
        %vm673 = vcmp.ge.s32.totalorder %v654, %v670
        %vm674 = vcmp.ge.s32.totalorder %v655, %v670
        %vm675 = vcmp.ge.s32.totalorder %v656, %v670
        %vm676 = vcmp.ge.s32.totalorder %v657, %v670
        %vm677 = vcmp.ge.s32.totalorder %v658, %v670
        %vm678 = vcmp.ge.s32.totalorder %v659, %v670
        %vm679 = vcmp.ge.s32.totalorder %v660, %v670
        %vm680 = vcmp.ge.s32.totalorder %v661, %v670
        %vm681 = vcmp.ge.s32.totalorder %v662, %v670
        %vm682 = vcmp.ge.s32.totalorder %v663, %v670
        %vm683 = vcmp.ge.s32.totalorder %v664, %v670
        %vm684 = vcmp.ge.s32.totalorder %v665, %v670
        %vm685 = vcmp.ge.s32.totalorder %v666, %v670
        %vm686 = vcmp.ge.s32.totalorder %v667, %v670
        %v687 = vadd.s32 %v669, 1
        %v688 = vmul.u32 %v687, 32
        %vm689 = vcmp.lt.s32.totalorder %v652, %v688
        %vm690 = vcmp.lt.s32.totalorder %v653, %v688
        %vm691 = vcmp.lt.s32.totalorder %v654, %v688
        %vm692 = vcmp.lt.s32.totalorder %v655, %v688
        %vm693 = vcmp.lt.s32.totalorder %v656, %v688
        %vm694 = vcmp.lt.s32.totalorder %v657, %v688
        %vm695 = vcmp.lt.s32.totalorder %v658, %v688
        %vm696 = vcmp.lt.s32.totalorder %v659, %v688
        %vm697 = vcmp.lt.s32.totalorder %v660, %v688
        %vm698 = vcmp.lt.s32.totalorder %v661, %v688
        %vm699 = vcmp.lt.s32.totalorder %v662, %v688
        %vm700 = vcmp.lt.s32.totalorder %v663, %v688
        %vm701 = vcmp.lt.s32.totalorder %v664, %v688
        %vm702 = vcmp.lt.s32.totalorder %v665, %v688
        %vm703 = vcmp.lt.s32.totalorder %v666, %v688
        %vm704 = vcmp.lt.s32.totalorder %v667, %v688
        %vm705 = vmand %vm671, %vm689
        %vm706 = vmand %vm672, %vm690
        %vm707 = vmand %vm673, %vm691
        %vm708 = vmand %vm674, %vm692
        %vm709 = vmand %vm675, %vm693
        %vm710 = vmand %vm676, %vm694
        %vm711 = vmand %vm677, %vm695
        %vm712 = vmand %vm678, %vm696
        %vm713 = vmand %vm679, %vm697
        %vm714 = vmand %vm680, %vm698
        %vm715 = vmand %vm681, %vm699
        %vm716 = vmand %vm682, %vm700
        %vm717 = vmand %vm683, %vm701
        %vm718 = vmand %vm684, %vm702
        %vm719 = vmand %vm685, %vm703
        %vm720 = vmand %vm686, %vm704
        %v721 = vsel %vm705, 0.17677669, 0.0
        %v722 = vsel %vm706, 0.17677669, 0.0
        %v723 = vsel %vm707, 0.17677669, 0.0
        %v724 = vsel %vm708, 0.17677669, 0.0
        %v725 = vsel %vm709, 0.17677669, 0.0
        %v726 = vsel %vm710, 0.17677669, 0.0
        %v727 = vsel %vm711, 0.17677669, 0.0
        %v728 = vsel %vm712, 0.17677669, 0.0
        %v729 = vsel %vm713, 0.17677669, 0.0
        %v730 = vsel %vm714, 0.17677669, 0.0
        %v731 = vsel %vm715, 0.17677669, 0.0
        %v732 = vsel %vm716, 0.17677669, 0.0
        %v733 = vsel %vm717, 0.17677669, 0.0
        %v734 = vsel %vm718, 0.17677669, 0.0
        %v735 = vsel %vm719, 0.17677669, 0.0
        %v736 = vsel %vm720, 0.17677669, 0.0
        %v737 = vmul.u32 %v652, 32
        %vm738 = vcmp.ge.s32.totalorder %v669, %v737
        %v739 = vadd.s32 %v652, 1
        %v740 = vmul.u32 %v739, 32
        %vm741 = vcmp.lt.s32.totalorder %v669, %v740
        %vm742 = vmand %vm738, %vm741
        %v743 = vsel %vm742, 1.0, 0.0
        %v744 = vld [vmem:[%s358] ss:$8 sm:$0x7]
        %v746 = vlaneseq
        %v747 = vshrl.u32 %v746, 7
        %v748 = vsub.s32 0, %v747
        %v749 = vrot.slane %v744, %v748
        %v750 = vlaneseq
        %v751 = vshrl.u32 %v750, 7
        %v752 = vsub.s32 1, %v751
        %v753 = vrot.slane %v744, %v752
        %v754 = vlaneseq
        %v755 = vshrl.u32 %v754, 7
        %v756 = vsub.s32 2, %v755
        %v757 = vrot.slane %v744, %v756
        %v793 = vunpack.c.l.b16 %v555
        %v794 = vunpack.c.h.b16 %v555
        %v795 = vunpack.c.l.b16 %v556
        %v796 = vunpack.c.l.b16 %v557
        %v797 = vunpack.c.h.b16 %v557
        %v798 = vunpack.c.l.b16 %v558
        %v799 = vunpack.c.l.b16 %v559
        %v800 = vunpack.c.h.b16 %v559
        %v801 = vunpack.c.l.b16 %v560
        %v802 = vunpack.c.l.b16 %v561
        %v803 = vunpack.c.h.b16 %v561
        %v804 = vunpack.c.l.b16 %v562
        %v805 = vunpack.c.l.b16 %v563
        %v806 = vunpack.c.h.b16 %v563
        %v807 = vunpack.c.l.b16 %v564
        %v808 = vunpack.c.l.b16 %v565
        %v809 = vunpack.c.h.b16 %v565
        %v810 = vunpack.c.l.b16 %v566
        %v811 = vunpack.c.l.b16 %v567
        %v812 = vunpack.c.h.b16 %v567
        %v813 = vunpack.c.l.b16 %v568
        %v814 = vunpack.c.l.b16 %v569
        %v815 = vunpack.c.h.b16 %v569
        %v816 = vunpack.c.l.b16 %v570
        %v817 = vunpack.c.l.b16 %v571
        %v818 = vunpack.c.h.b16 %v571
        %v819 = vunpack.c.l.b16 %v572
        %v820 = vunpack.c.l.b16 %v573
        %v821 = vunpack.c.h.b16 %v573
        %v822 = vunpack.c.l.b16 %v574
        %v823 = vunpack.c.l.b16 %v575
        %v824 = vunpack.c.h.b16 %v575
        %v825 = vunpack.c.l.b16 %v576
        %v826 = vunpack.c.l.b16 %v577
        %v827 = vunpack.c.h.b16 %v577
        %v828 = vunpack.c.l.b16 %v578
        %v829 = vunpack.c.l.b16 %v579
        %v830 = vunpack.c.h.b16 %v579
        %v831 = vunpack.c.l.b16 %v580
        %v832 = vunpack.c.l.b16 %v581
        %v833 = vunpack.c.h.b16 %v581
        %v834 = vunpack.c.l.b16 %v582
        %v835 = vunpack.c.l.b16 %v583
        %v836 = vunpack.c.h.b16 %v583
        %v837 = vunpack.c.l.b16 %v584
        %v838 = vunpack.c.l.b16 %v585
        %v839 = vunpack.c.h.b16 %v585
        %v840 = vunpack.c.l.b16 %v586
        %v841 = vpack.c.b16 %v796, %v793
        %v842 = vpack.c.b16 %v797, %v794
        %v843 = vpack.c.b16 %v798, %v795
        %v844 = vpack.c.b16 %v802, %v799
        %v845 = vpack.c.b16 %v803, %v800
        %v846 = vpack.c.b16 %v804, %v801
        %v847 = vpack.c.b16 %v808, %v805
        %v848 = vpack.c.b16 %v809, %v806
        %v849 = vpack.c.b16 %v810, %v807
        %v850 = vpack.c.b16 %v814, %v811
        %v851 = vpack.c.b16 %v815, %v812
        %v852 = vpack.c.b16 %v816, %v813
        %v853 = vpack.c.b16 %v820, %v817
        %v854 = vpack.c.b16 %v821, %v818
        %v855 = vpack.c.b16 %v822, %v819
        %v856 = vpack.c.b16 %v826, %v823
        %v857 = vpack.c.b16 %v827, %v824
        %v858 = vpack.c.b16 %v828, %v825
        %v859 = vpack.c.b16 %v832, %v829
        %v860 = vpack.c.b16 %v833, %v830
        %v861 = vpack.c.b16 %v834, %v831
        %v862 = vpack.c.b16 %v838, %v835
        %v863 = vpack.c.b16 %v839, %v836
        %v864 = vpack.c.b16 %v840, %v837
        %889 = vmatprep.subr.bf16.mxu0 %v863
        %890 = vmatpush1.bf16.msra.mxu0 %v862
        %891 = vmatprep.subr.bf16.mxu0 %v860
        %892 = vmatpush1.bf16.msra.mxu0 %v859
        %893 = vmatprep.subr.bf16.mxu0 %v857
        %894 = vmatpush1.bf16.msra.mxu0 %v856
        %895 = vmatprep.subr.bf16.mxu0 %v854
        %896 = vmatpush1.bf16.msra.mxu0 %v853
        %897 = vmatprep.subr.bf16.mxu0 %v851
        %898 = vmatpush1.bf16.msra.mxu0 %v850
        %899 = vmatprep.subr.bf16.mxu0 %v848
        %900 = vmatpush1.bf16.msra.mxu0 %v847
        %901 = vmatprep.subr.bf16.mxu0 %v845
        %902 = vmatpush1.bf16.msra.mxu0 %v844
        %903 = vmatprep.subr.bf16.mxu0 %v842
        %904 = vmatpush1.bf16.msra.mxu0 %v841
        %905 = vmatprep.subr.bf16.mxu0 0
        %906 = vmatpush2.bf16.msra.mxu0 0
        %907 = vmatprep.subr.bf16.mxu0 0
        %908 = vmatpush2.bf16.msra.mxu0 0
        %909 = vmatprep.subr.bf16.mxu0 0
        %910 = vmatpush2.bf16.msra.mxu0 0
        %911 = vmatprep.subr.bf16.mxu0 0
        %912 = vmatpush2.bf16.msra.mxu0 0
        %913 = vmatprep.subr.bf16.mxu0 0
        %914 = vmatpush2.bf16.msra.mxu0 0
        %915 = vmatprep.subr.bf16.mxu0 0
        %916 = vmatpush2.bf16.msra.mxu0 0
        %917 = vmatprep.subr.bf16.mxu0 0
        %918 = vmatpush2.bf16.msra.mxu0 0
        %919 = vmatprep.subr.bf16.mxu0 0
        %920 = vmatpush2.bf16.msra.mxu0 0
        %921 = vmatprep.mubr.bf16.mxu0 0
        %922 = vmatmul.mubr.bf16.gmra.mxu0 %v552
        %v923 = vpop.f32.mrf.mxu0
        %v924 = vadd.f32 %v749, %v923
        %v925 = vpop.f32.mrf.mxu0
        %v926 = vadd.f32 %v753, %v925
        %v927 = vpop.f32.mrf.mxu0
        %v928 = vadd.f32 %v749, %v927
        %v929 = vpop.f32.mrf.mxu0
        %v930 = vadd.f32 %v753, %v929
        %931 = vmatprep.mubr.bf16.mxu0 0
        %932 = vmatmul.mubr.bf16.gmra.mxu0 %v553
        %v933 = vpop.f32.mrf.mxu0
        %v934 = vadd.f32 %v749, %v933
        %v935 = vpop.f32.mrf.mxu0
        %v936 = vadd.f32 %v753, %v935
        %v937 = vpop.f32.mrf.mxu0
        %v938 = vadd.f32 %v749, %v937
        %v939 = vpop.f32.mrf.mxu0
        %v940 = vadd.f32 %v753, %v939
        %941 = vmatprep.mubr.bf16.mxu0 0
        %942 = vmatmul.mubr.bf16.gmra.mxu0 %v554
        %v943 = vpop.f32.mrf.mxu0
        %v944 = vadd.f32 %v749, %v943
        %v945 = vpop.f32.mrf.mxu0
        %v946 = vadd.f32 %v753, %v945
        %v947 = vpop.f32.mrf.mxu0
        %v948 = vadd.f32 %v749, %v947
        %v949 = vpop.f32.mrf.mxu0
        %v950 = vadd.f32 %v753, %v949
        %951 = vdwg.mxu0
        %952 = vmatprep.subr.bf16.mxu0 0
        %953 = vmatpush1.bf16.msra.mxu0 %v864
        %954 = vmatprep.subr.bf16.mxu0 0
        %955 = vmatpush1.bf16.msra.mxu0 %v861
        %956 = vmatprep.subr.bf16.mxu0 0
        %957 = vmatpush1.bf16.msra.mxu0 %v858
        %958 = vmatprep.subr.bf16.mxu0 0
        %959 = vmatpush1.bf16.msra.mxu0 %v855
        %960 = vmatprep.subr.bf16.mxu0 0
        %961 = vmatpush1.bf16.msra.mxu0 %v852
        %962 = vmatprep.subr.bf16.mxu0 0
        %963 = vmatpush1.bf16.msra.mxu0 %v849
        %964 = vmatprep.subr.bf16.mxu0 0
        %965 = vmatpush1.bf16.msra.mxu0 %v846
        %966 = vmatprep.subr.bf16.mxu0 0
        %967 = vmatpush1.bf16.msra.mxu0 %v843
        %968 = vmatprep.subr.bf16.mxu0 0
        %969 = vmatpush2.bf16.msra.mxu0 0
        %970 = vmatprep.subr.bf16.mxu0 0
        %971 = vmatpush2.bf16.msra.mxu0 0
        %972 = vmatprep.subr.bf16.mxu0 0
        %973 = vmatpush2.bf16.msra.mxu0 0
        %974 = vmatprep.subr.bf16.mxu0 0
        %975 = vmatpush2.bf16.msra.mxu0 0
        %976 = vmatprep.subr.bf16.mxu0 0
        %977 = vmatpush2.bf16.msra.mxu0 0
        %978 = vmatprep.subr.bf16.mxu0 0
        %979 = vmatpush2.bf16.msra.mxu0 0
        %980 = vmatprep.subr.bf16.mxu0 0
        %981 = vmatpush2.bf16.msra.mxu0 0
        %982 = vmatprep.subr.bf16.mxu0 0
        %983 = vmatpush2.bf16.msra.mxu0 0
        %984 = vmatprep.mubr.bf16.mxu0 0
        %985 = vmatmul.mubr.bf16.gmra.mxu0 %v552
        %v986 = vpop.f32.mrf.mxu0
        %v987 = vadd.f32 %v757, %v986
        %v988 = vpop.f32.mrf.mxu0
        %v989 = vpop.f32.mrf.mxu0
        %v990 = vadd.f32 %v757, %v989
        %v991 = vpop.f32.mrf.mxu0
        %992 = vmatprep.mubr.bf16.mxu0 0
        %993 = vmatmul.mubr.bf16.gmra.mxu0 %v553
        %v994 = vpop.f32.mrf.mxu0
        %v995 = vadd.f32 %v757, %v994
        %v996 = vpop.f32.mrf.mxu0
        %v997 = vpop.f32.mrf.mxu0
        %v998 = vadd.f32 %v757, %v997
        %v999 = vpop.f32.mrf.mxu0
        %1000 = vmatprep.mubr.bf16.mxu0 0
        %1001 = vmatmul.mubr.bf16.gmra.mxu0 %v554
        %v1002 = vpop.f32.mrf.mxu0
        %v1003 = vadd.f32 %v757, %v1002
        %v1004 = vpop.f32.mrf.mxu0
        %v1005 = vpop.f32.mrf.mxu0
        %v1006 = vadd.f32 %v757, %v1005
        %v1007 = vpop.f32.mrf.mxu0
        %1008 = vdwg.mxu0
        %v1009 = vmul.f32 %v924, %v926
        %v1010 = vmul.f32 %v928, %v930
        %v1011 = vmul.f32 %v934, %v936
        %v1012 = vmul.f32 %v924, %v940
        %v1013 = vmul.f32 %v928, %v946
        %v1014 = vmul.f32 %v934, %v950
        %v1015 = vmul.f32 %v938, %v926
        %v1016 = vmul.f32 %v944, %v930
        %v1017 = vmul.f32 %v948, %v936
        %v1018 = vmul.f32 %v938, %v940
        %v1019 = vmul.f32 %v944, %v946
        %v1020 = vmul.f32 %v948, %v950
        %1021 = vmatprep.subr.mxu0 0.0
        %1022 = vmatpush1.msra.mxu0 %v736
        %1023 = vmatprep.subr.mxu0 0.0
        %1024 = vmatpush1.msra.mxu0 %v735
        %1025 = vmatprep.subr.mxu0 0.0
        %1026 = vmatpush1.msra.mxu0 %v734
        %1027 = vmatprep.subr.mxu0 0.0
        %1028 = vmatpush1.msra.mxu0 %v733
        %1029 = vmatprep.subr.mxu0 0.0
        %1030 = vmatpush1.msra.mxu0 %v732
        %1031 = vmatprep.subr.mxu0 0.0
        %1032 = vmatpush1.msra.mxu0 %v731
        %1033 = vmatprep.subr.mxu0 0.0
        %1034 = vmatpush1.msra.mxu0 %v730
        %1035 = vmatprep.subr.mxu0 0.0
        %1036 = vmatpush1.msra.mxu0 %v729
        %1037 = vmatprep.subr.mxu0 0.0
        %1038 = vmatpush1.msra.mxu0 %v728
        %1039 = vmatprep.subr.mxu0 0.0
        %1040 = vmatpush1.msra.mxu0 %v727
        %1041 = vmatprep.subr.mxu0 0.0
        %1042 = vmatpush1.msra.mxu0 %v726
        %1043 = vmatprep.subr.mxu0 0.0
        %1044 = vmatpush1.msra.mxu0 %v725
        %1045 = vmatprep.subr.mxu0 0.0
        %1046 = vmatpush1.msra.mxu0 %v724
        %1047 = vmatprep.subr.mxu0 0.0
        %1048 = vmatpush1.msra.mxu0 %v723
        %1049 = vmatprep.subr.mxu0 0.0
        %1050 = vmatpush1.msra.mxu0 %v722
        %1051 = vmatprep.subr.mxu0 0.0
        %1052 = vmatpush1.msra.mxu0 %v721
        %1053 = vmatprep.subr.mxu0 0.0
        %1054 = vmatpush2.msra.mxu0 0.0
        %1055 = vmatprep.subr.mxu0 0.0
        %1056 = vmatpush2.msra.mxu0 0.0
        %1057 = vmatprep.subr.mxu0 0.0
        %1058 = vmatpush2.msra.mxu0 0.0
        %1059 = vmatprep.subr.mxu0 0.0
        %1060 = vmatpush2.msra.mxu0 0.0
        %1061 = vmatprep.subr.mxu0 0.0
        %1062 = vmatpush2.msra.mxu0 0.0
        %1063 = vmatprep.subr.mxu0 0.0
        %1064 = vmatpush2.msra.mxu0 0.0
        %1065 = vmatprep.subr.mxu0 0.0
        %1066 = vmatpush2.msra.mxu0 0.0
        %1067 = vmatprep.subr.mxu0 0.0
        %1068 = vmatpush2.msra.mxu0 0.0
        %1069 = vmatprep.subr.mxu0 0.0
        %1070 = vmatpush2.msra.mxu0 0.0
        %1071 = vmatprep.subr.mxu0 0.0
        %1072 = vmatpush2.msra.mxu0 0.0
        %1073 = vmatprep.subr.mxu0 0.0
        %1074 = vmatpush2.msra.mxu0 0.0
        %1075 = vmatprep.subr.mxu0 0.0
        %1076 = vmatpush2.msra.mxu0 0.0
        %1077 = vmatprep.subr.mxu0 0.0
        %1078 = vmatpush2.msra.mxu0 0.0
        %1079 = vmatprep.subr.mxu0 0.0
        %1080 = vmatpush2.msra.mxu0 0.0
        %1081 = vmatprep.subr.mxu0 0.0
        %1082 = vmatpush2.msra.mxu0 0.0
        %1083 = vmatprep.subr.mxu0 0.0
        %1084 = vmatpush2.msra.mxu0 0.0
        %1085 = vmatprep.mubr.f32.mxu0 0.0
        %1086 = vmatmul.mubr.f32.gmra.mxu0 %v1009
        %v1087 = vpop.f32.mrf.mxu0
        %v1088 = vadd.f32 0.0, %v1087
        %v1089 = vpop.f32.mrf.mxu0
        %1090 = vmatprep.mubr.f32.mxu0 0.0
        %1091 = vmatmul.mubr.f32.gmra.mxu0 %v1010
        %v1092 = vpop.f32.mrf.mxu0
        %v1093 = vadd.f32 0.0, %v1092
        %v1094 = vpop.f32.mrf.mxu0
        %1095 = vmatprep.mubr.f32.mxu0 0.0
        %1096 = vmatmul.mubr.f32.gmra.mxu0 %v1011
        %v1097 = vpop.f32.mrf.mxu0
        %v1098 = vadd.f32 0.0, %v1097
        %v1099 = vpop.f32.mrf.mxu0
        %1100 = vmatprep.mubr.f32.mxu0 0.0
        %1101 = vmatmul.mubr.f32.gmra.mxu0 %v1012
        %v1102 = vpop.f32.mrf.mxu0
        %v1103 = vadd.f32 0.0, %v1102
        %v1104 = vpop.f32.mrf.mxu0
        %1105 = vmatprep.mubr.f32.mxu0 0.0
        %1106 = vmatmul.mubr.f32.gmra.mxu0 %v1013
        %v1107 = vpop.f32.mrf.mxu0
        %v1108 = vadd.f32 0.0, %v1107
        %v1109 = vpop.f32.mrf.mxu0
        %1110 = vmatprep.mubr.f32.mxu0 0.0
        %1111 = vmatmul.mubr.f32.gmra.mxu0 %v1014
        %v1112 = vpop.f32.mrf.mxu0
        %v1113 = vadd.f32 0.0, %v1112
        %v1114 = vpop.f32.mrf.mxu0
        %1115 = vmatprep.mubr.f32.mxu0 0.0
        %1116 = vmatmul.mubr.f32.gmra.mxu0 %v1015
        %v1117 = vpop.f32.mrf.mxu0
        %v1118 = vadd.f32 0.0, %v1117
        %v1119 = vpop.f32.mrf.mxu0
        %1120 = vmatprep.mubr.f32.mxu0 0.0
        %1121 = vmatmul.mubr.f32.gmra.mxu0 %v1016
        %v1122 = vpop.f32.mrf.mxu0
        %v1123 = vadd.f32 0.0, %v1122
        %v1124 = vpop.f32.mrf.mxu0
        %1125 = vmatprep.mubr.f32.mxu0 0.0
        %1126 = vmatmul.mubr.f32.gmra.mxu0 %v1017
        %v1127 = vpop.f32.mrf.mxu0
        %v1128 = vadd.f32 0.0, %v1127
        %v1129 = vpop.f32.mrf.mxu0
        %1130 = vmatprep.mubr.f32.mxu0 0.0
        %1131 = vmatmul.mubr.f32.gmra.mxu0 %v1018
        %v1132 = vpop.f32.mrf.mxu0
        %v1133 = vadd.f32 0.0, %v1132
        %v1134 = vpop.f32.mrf.mxu0
        %1135 = vmatprep.mubr.f32.mxu0 0.0
        %1136 = vmatmul.mubr.f32.gmra.mxu0 %v1019
        %v1137 = vpop.f32.mrf.mxu0
        %v1138 = vadd.f32 0.0, %v1137
        %v1139 = vpop.f32.mrf.mxu0
        %1140 = vmatprep.mubr.f32.mxu0 0.0
        %1141 = vmatmul.mubr.f32.gmra.mxu0 %v1020
        %v1142 = vpop.f32.mrf.mxu0
        %v1143 = vadd.f32 0.0, %v1142
        %v1144 = vpop.f32.mrf.mxu0
        %1145 = vdwg.mxu0
        %v1146 = vmax.f32 %v1088, %v1103
        %v1147 = vmax.f32 %v1093, %v1108
        %v1148 = vmax.f32 %v1098, %v1113
        %v1149 = vsub.f32 %v1088, %v1146
        %v1150 = vsub.f32 %v1093, %v1147
        %v1151 = vsub.f32 %v1098, %v1148
        %v1152 = vmul.f32 %v1149, 1.442695
        %v1153 = vpow.pop %v1152
        %v1154 = vmul.f32 %v1150, 1.442695
        %v1155 = vpow.pop %v1154
        %v1156 = vmul.f32 %v1151, 1.442695
        %v1157 = vpow.pop %v1156
        %v1158 = vsub.f32 %v1103, %v1146
        %v1159 = vsub.f32 %v1108, %v1147
        %v1160 = vsub.f32 %v1113, %v1148
        %v1161 = vmul.f32 %v1158, 1.442695
        %v1162 = vpow.pop %v1161
        %v1163 = vmul.f32 %v1159, 1.442695
        %v1164 = vpow.pop %v1163
        %v1165 = vmul.f32 %v1160, 1.442695
        %v1166 = vpow.pop %v1165
        %v1167 = vadd.f32 %v1153, %v1162
        %v1168 = vadd.f32 %v1155, %v1164
        %v1169 = vadd.f32 %v1157, %v1166
        %v1170 = vrcp.pop %v1167
        %v1171 = vrcp.pop %v1168
        %v1172 = vrcp.pop %v1169
        %v1173 = vmul.f32 %v1153, %v1170
        %v1174 = vmul.f32 %v1155, %v1171
        %v1175 = vmul.f32 %v1157, %v1172
        %v1176 = vmul.f32 %v1162, %v1170
        %v1177 = vmul.f32 %v1164, %v1171
        %v1178 = vmul.f32 %v1166, %v1172
        %v1179 = vmax.f32 %v1118, %v1133
        %v1180 = vmax.f32 %v1123, %v1138
        %v1181 = vmax.f32 %v1128, %v1143
        %v1182 = vsub.f32 %v1118, %v1179
        %v1183 = vsub.f32 %v1123, %v1180
        %v1184 = vsub.f32 %v1128, %v1181
        %v1185 = vmul.f32 %v1182, 1.442695
        %v1186 = vpow.pop %v1185
        %v1187 = vmul.f32 %v1183, 1.442695
        %v1188 = vpow.pop %v1187
        %v1189 = vmul.f32 %v1184, 1.442695
        %v1190 = vpow.pop %v1189
        %v1191 = vsub.f32 %v1133, %v1179
        %v1192 = vsub.f32 %v1138, %v1180
        %v1193 = vsub.f32 %v1143, %v1181
        %v1194 = vmul.f32 %v1191, 1.442695
        %v1195 = vpow.pop %v1194
        %v1196 = vmul.f32 %v1192, 1.442695
        %v1197 = vpow.pop %v1196
        %v1198 = vmul.f32 %v1193, 1.442695
        %v1199 = vpow.pop %v1198
        %v1200 = vadd.f32 %v1186, %v1195
        %v1201 = vadd.f32 %v1188, %v1197
        %v1202 = vadd.f32 %v1190, %v1199
        %v1203 = vrcp.pop %v1200
        %v1204 = vrcp.pop %v1201
        %v1205 = vrcp.pop %v1202
        %v1206 = vmul.f32 %v1186, %v1203
        %v1207 = vmul.f32 %v1188, %v1204
        %v1208 = vmul.f32 %v1190, %v1205
        %v1209 = vmul.f32 %v1195, %v1203
        %v1210 = vmul.f32 %v1197, %v1204
        %v1211 = vmul.f32 %v1199, %v1205
        %vm1212 = vcmask 31744
        %v1214 = vsel %vm1212, %v1173, 0
        %v1217 = vsel %vm1212, %v1174, 0
        %v1220 = vsel %vm1212, %v1175, 0
        %v1223 = vsel %vm1212, %v1176, 0
        %v1226 = vsel %vm1212, %v1177, 0
        %v1229 = vsel %vm1212, %v1178, 0
        %v1232 = vsel %vm1212, %v1206, 0
        %v1235 = vsel %vm1212, %v1207, 0
        %v1238 = vsel %vm1212, %v1208, 0
        %v1241 = vsel %vm1212, %v1209, 0
        %v1244 = vsel %vm1212, %v1210, 0
        %v1247 = vsel %vm1212, %v1211, 0
        %vm1249 = vcmask 1043456
        %v1251 = vsel %vm1249, %v743, 0
        %1253 = vmatprep.subr.mxu0 0.0
        %1254 = vmatpush1.msra.mxu0 0.0
        %1255 = vmatprep.subr.mxu0 0.0
        %1256 = vmatpush1.msra.mxu0 0.0
        %1257 = vmatprep.subr.mxu0 0.0
        %1258 = vmatpush1.msra.mxu0 0.0
        %1259 = vmatprep.subr.mxu0 0.0
        %1260 = vmatpush1.msra.mxu0 0.0
        %1261 = vmatprep.subr.mxu0 0.0
        %1262 = vmatpush1.msra.mxu0 0.0
        %1263 = vmatprep.subr.mxu0 0.0
        %1264 = vmatpush1.msra.mxu0 0.0
        %1265 = vmatprep.subr.mxu0 0.0
        %1266 = vmatpush1.msra.mxu0 0.0
        %1267 = vmatprep.subr.mxu0 0.0
        %1268 = vmatpush1.msra.mxu0 0.0
        %1269 = vmatprep.subr.mxu0 0.0
        %1270 = vmatpush1.msra.mxu0 0.0
        %1271 = vmatprep.subr.mxu0 0.0
        %1272 = vmatpush1.msra.mxu0 0.0
        %1273 = vmatprep.subr.mxu0 0.0
        %1274 = vmatpush1.msra.mxu0 0.0
        %1275 = vmatprep.subr.mxu0 0.0
        %1276 = vmatpush1.msra.mxu0 0.0
        %1277 = vmatprep.subr.mxu0 0.0
        %1278 = vmatpush1.msra.mxu0 0.0
        %1279 = vmatprep.subr.mxu0 0.0
        %1280 = vmatpush1.msra.mxu0 0.0
        %1281 = vmatprep.subr.mxu0 0.0
        %1282 = vmatpush1.msra.mxu0 0.0
        %1283 = vmatprep.subr.mxu0 0.0
        %1284 = vmatpush1.msra.mxu0 %v1251
        %1285 = vmatprep.subr.mxu0 0.0
        %1286 = vmatpush2.msra.mxu0 0.0
        %1287 = vmatprep.subr.mxu0 0.0
        %1288 = vmatpush2.msra.mxu0 0.0
        %1289 = vmatprep.subr.mxu0 0.0
        %1290 = vmatpush2.msra.mxu0 0.0
        %1291 = vmatprep.subr.mxu0 0.0
        %1292 = vmatpush2.msra.mxu0 0.0
        %1293 = vmatprep.subr.mxu0 0.0
        %1294 = vmatpush2.msra.mxu0 0.0
        %1295 = vmatprep.subr.mxu0 0.0
        %1296 = vmatpush2.msra.mxu0 0.0
        %1297 = vmatprep.subr.mxu0 0.0
        %1298 = vmatpush2.msra.mxu0 0.0
        %1299 = vmatprep.subr.mxu0 0.0
        %1300 = vmatpush2.msra.mxu0 0.0
        %1301 = vmatprep.subr.mxu0 0.0
        %1302 = vmatpush2.msra.mxu0 0.0
        %1303 = vmatprep.subr.mxu0 0.0
        %1304 = vmatpush2.msra.mxu0 0.0
        %1305 = vmatprep.subr.mxu0 0.0
        %1306 = vmatpush2.msra.mxu0 0.0
        %1307 = vmatprep.subr.mxu0 0.0
        %1308 = vmatpush2.msra.mxu0 0.0
        %1309 = vmatprep.subr.mxu0 0.0
        %1310 = vmatpush2.msra.mxu0 0.0
        %1311 = vmatprep.subr.mxu0 0.0
        %1312 = vmatpush2.msra.mxu0 0.0
        %1313 = vmatprep.subr.mxu0 0.0
        %1314 = vmatpush2.msra.mxu0 0.0
        %1315 = vmatprep.subr.mxu0 0.0
        %1316 = vmatpush2.msra.mxu0 0.0
        %1317 = vmatprep.mubr.f32.mxu0 0.0
        %1318 = vmatmul.mubr.f32.gmra.mxu0 %v1214
        %v1319 = vpop.f32.mrf.mxu0
        %v1320 = vadd.f32 0.0, %v1319
        %v1321 = vpop.f32.mrf.mxu0
        %1322 = vmatprep.mubr.f32.mxu0 0.0
        %1323 = vmatmul.mubr.f32.gmra.mxu0 %v1217
        %v1324 = vpop.f32.mrf.mxu0
        %v1325 = vadd.f32 0.0, %v1324
        %v1326 = vpop.f32.mrf.mxu0
        %1327 = vmatprep.mubr.f32.mxu0 0.0
        %1328 = vmatmul.mubr.f32.gmra.mxu0 %v1220
        %v1329 = vpop.f32.mrf.mxu0
        %v1330 = vadd.f32 0.0, %v1329
        %v1331 = vpop.f32.mrf.mxu0
        %1332 = vmatprep.mubr.f32.mxu0 0.0
        %1333 = vmatmul.mubr.f32.gmra.mxu0 %v1223
        %v1334 = vpop.f32.mrf.mxu0
        %v1335 = vadd.f32 0.0, %v1334
        %v1336 = vpop.f32.mrf.mxu0
        %1337 = vmatprep.mubr.f32.mxu0 0.0
        %1338 = vmatmul.mubr.f32.gmra.mxu0 %v1226
        %v1339 = vpop.f32.mrf.mxu0
        %v1340 = vadd.f32 0.0, %v1339
        %v1341 = vpop.f32.mrf.mxu0
        %1342 = vmatprep.mubr.f32.mxu0 0.0
        %1343 = vmatmul.mubr.f32.gmra.mxu0 %v1229
        %v1344 = vpop.f32.mrf.mxu0
        %v1345 = vadd.f32 0.0, %v1344
        %v1346 = vpop.f32.mrf.mxu0
        %1347 = vmatprep.mubr.f32.mxu0 0.0
        %1348 = vmatmul.mubr.f32.gmra.mxu0 %v1232
        %v1349 = vpop.f32.mrf.mxu0
        %v1350 = vadd.f32 0.0, %v1349
        %v1351 = vpop.f32.mrf.mxu0
        %1352 = vmatprep.mubr.f32.mxu0 0.0
        %1353 = vmatmul.mubr.f32.gmra.mxu0 %v1235
        %v1354 = vpop.f32.mrf.mxu0
        %v1355 = vadd.f32 0.0, %v1354
        %v1356 = vpop.f32.mrf.mxu0
        %1357 = vmatprep.mubr.f32.mxu0 0.0
        %1358 = vmatmul.mubr.f32.gmra.mxu0 %v1238
        %v1359 = vpop.f32.mrf.mxu0
        %v1360 = vadd.f32 0.0, %v1359
        %v1361 = vpop.f32.mrf.mxu0
        %1362 = vmatprep.mubr.f32.mxu0 0.0
        %1363 = vmatmul.mubr.f32.gmra.mxu0 %v1241
        %v1364 = vpop.f32.mrf.mxu0
        %v1365 = vadd.f32 0.0, %v1364
        %v1366 = vpop.f32.mrf.mxu0
        %1367 = vmatprep.mubr.f32.mxu0 0.0
        %1368 = vmatmul.mubr.f32.gmra.mxu0 %v1244
        %v1369 = vpop.f32.mrf.mxu0
        %v1370 = vadd.f32 0.0, %v1369
        %v1371 = vpop.f32.mrf.mxu0
        %1372 = vmatprep.mubr.f32.mxu0 0.0
        %1373 = vmatmul.mubr.f32.gmra.mxu0 %v1247
        %v1374 = vpop.f32.mrf.mxu0
        %v1375 = vadd.f32 0.0, %v1374
        %v1376 = vpop.f32.mrf.mxu0
        %1377 = vdwg.mxu0
        %v1378 = vmul.f32 %v1320, %v987
        %v1379 = vmul.f32 %v1325, %v990
        %v1380 = vmul.f32 %v1330, %v995
        %v1381 = vmul.f32 %v1335, %v998
        %v1382 = vmul.f32 %v1340, %v1003
        %v1383 = vmul.f32 %v1345, %v1006
        %v1384 = vadd.f32 %v1378, %v1381
        %v1385 = vadd.f32 %v1379, %v1382
        %v1386 = vadd.f32 %v1380, %v1383
        %v1387 = vmul.f32 %v1350, %v987
        %v1388 = vmul.f32 %v1355, %v990
        %v1389 = vmul.f32 %v1360, %v995
        %v1390 = vmul.f32 %v1365, %v998
        %v1391 = vmul.f32 %v1370, %v1003
        %v1392 = vmul.f32 %v1375, %v1006
        %v1393 = vadd.f32 %v1387, %v1390
        %v1394 = vadd.f32 %v1388, %v1391
        %v1395 = vadd.f32 %v1389, %v1392
        %v1396 = vpack.c.bf16 %v1385, %v1384
        %v1397 = vpack.c.bf16 %v1393, %v1386
        %v1398 = vpack.c.bf16 %v1395, %v1394
        %v1399 = vld [vmem:[%s358 + $0x1] ss:$0 sm:$0xff]
        %v1416 = vunpack.c.l.b16 %v603
        %v1417 = vunpack.c.l.b16 %v604
        %v1418 = vunpack.c.l.b16 %v605
        %v1419 = vunpack.c.l.b16 %v606
        %v1420 = vunpack.c.l.b16 %v607
        %v1421 = vunpack.c.l.b16 %v608
        %v1422 = vunpack.c.l.b16 %v609
        %v1423 = vunpack.c.l.b16 %v610
        %v1424 = vunpack.c.l.b16 %v611
        %v1425 = vunpack.c.l.b16 %v612
        %v1426 = vunpack.c.l.b16 %v613
        %v1427 = vunpack.c.l.b16 %v614
        %v1428 = vunpack.c.l.b16 %v615
        %v1429 = vunpack.c.l.b16 %v616
        %v1430 = vunpack.c.l.b16 %v617
        %v1431 = vunpack.c.l.b16 %v618
        %v1432 = vpack.c.b16 %v1417, %v1416
        %v1433 = vpack.c.b16 %v1419, %v1418
        %v1434 = vpack.c.b16 %v1421, %v1420
        %v1435 = vpack.c.b16 %v1423, %v1422
        %v1436 = vpack.c.b16 %v1425, %v1424
        %v1437 = vpack.c.b16 %v1427, %v1426
        %v1438 = vpack.c.b16 %v1429, %v1428
        %v1439 = vpack.c.b16 %v1431, %v1430
        %1448 = vmatprep.subr.bf16.mxu0 0
        %1449 = vmatpush1.bf16.msra.mxu0 %v1439
        %1450 = vmatprep.subr.bf16.mxu0 0
        %1451 = vmatpush1.bf16.msra.mxu0 %v1438
        %1452 = vmatprep.subr.bf16.mxu0 0
        %1453 = vmatpush1.bf16.msra.mxu0 %v1437
        %1454 = vmatprep.subr.bf16.mxu0 0
        %1455 = vmatpush1.bf16.msra.mxu0 %v1436
        %1456 = vmatprep.subr.bf16.mxu0 0
        %1457 = vmatpush1.bf16.msra.mxu0 %v1435
        %1458 = vmatprep.subr.bf16.mxu0 0
        %1459 = vmatpush1.bf16.msra.mxu0 %v1434
        %1460 = vmatprep.subr.bf16.mxu0 0
        %1461 = vmatpush1.bf16.msra.mxu0 %v1433
        %1462 = vmatprep.subr.bf16.mxu0 0
        %1463 = vmatpush1.bf16.msra.mxu0 %v1432
        %1464 = vmatprep.subr.bf16.mxu0 0
        %1465 = vmatpush2.bf16.msra.mxu0 0
        %1466 = vmatprep.subr.bf16.mxu0 0
        %1467 = vmatpush2.bf16.msra.mxu0 0
        %1468 = vmatprep.subr.bf16.mxu0 0
        %1469 = vmatpush2.bf16.msra.mxu0 0
        %1470 = vmatprep.subr.bf16.mxu0 0
        %1471 = vmatpush2.bf16.msra.mxu0 0
        %1472 = vmatprep.subr.bf16.mxu0 0
        %1473 = vmatpush2.bf16.msra.mxu0 0
        %1474 = vmatprep.subr.bf16.mxu0 0
        %1475 = vmatpush2.bf16.msra.mxu0 0
        %1476 = vmatprep.subr.bf16.mxu0 0
        %1477 = vmatpush2.bf16.msra.mxu0 0
        %1478 = vmatprep.subr.bf16.mxu0 0
        %1479 = vmatpush2.bf16.msra.mxu0 0
        %1480 = vmatprep.mubr.bf16.mxu0 0
        %1481 = vmatmul.mubr.bf16.gmra.mxu0 %v1396
        %v1482 = vpop.f32.mrf.mxu0
        %v1483 = vadd.f32 %v1399, %v1482
        %v1484 = vpop.f32.mrf.mxu0
        %v1485 = vpop.f32.mrf.mxu0
        %v1486 = vadd.f32 %v1399, %v1485
        %v1487 = vpop.f32.mrf.mxu0
        %1488 = vmatprep.mubr.bf16.mxu0 0
        %1489 = vmatmul.mubr.bf16.gmra.mxu0 %v1397
        %v1490 = vpop.f32.mrf.mxu0
        %v1491 = vadd.f32 %v1399, %v1490
        %v1492 = vpop.f32.mrf.mxu0
        %v1493 = vpop.f32.mrf.mxu0
        %v1494 = vadd.f32 %v1399, %v1493
        %v1495 = vpop.f32.mrf.mxu0
        %1496 = vmatprep.mubr.bf16.mxu0 0
        %1497 = vmatmul.mubr.bf16.gmra.mxu0 %v1398
        %v1498 = vpop.f32.mrf.mxu0
        %v1499 = vadd.f32 %v1399, %v1498
        %v1500 = vpop.f32.mrf.mxu0
        %v1501 = vpop.f32.mrf.mxu0
        %v1502 = vadd.f32 %v1399, %v1501
        %v1503 = vpop.f32.mrf.mxu0
        %1504 = vdwg.mxu0
        %v1505 = vadd.f32 %v546, %v1483
        %v1506 = vadd.f32 %v547, %v1486
        %v1507 = vadd.f32 %v548, %v1491
        %v1508 = vadd.f32 %v549, %v1494
        %v1509 = vadd.f32 %v550, %v1499
        %v1510 = vadd.f32 %v551, %v1502
        %1511 = vadd.xlane.f32.xlu0 %v1505
        %v1512 = vpop.xlane.xlu0 %1511
        %1513 = vadd.xlane.f32.xlu0 %v1506
        %v1514 = vpop.xlane.xlu0 %1513
        %1515 = vadd.xlane.f32.xlu0 %v1507
        %v1516 = vpop.xlane.xlu0 %1515
        %1517 = vadd.xlane.f32.xlu0 %v1508
        %v1518 = vpop.xlane.xlu0 %1517
        %1519 = vadd.xlane.f32.xlu0 %v1509
        %v1520 = vpop.xlane.xlu0 %1519
        %1521 = vadd.xlane.f32.xlu0 %v1510
        %v1522 = vpop.xlane.xlu0 %1521
        %v1523 = vrcp.pop 128.0
        %v1524 = vmul.f32 %v1512, %v1523
        %v1525 = vmul.f32 %v1514, %v1523
        %v1526 = vmul.f32 %v1516, %v1523
        %v1527 = vmul.f32 %v1518, %v1523
        %v1528 = vmul.f32 %v1520, %v1523
        %v1529 = vmul.f32 %v1522, %v1523
        %v1530 = vsub.f32 %v1505, %v1524
        %v1531 = vsub.f32 %v1506, %v1525
        %v1532 = vsub.f32 %v1507, %v1526
        %v1533 = vsub.f32 %v1508, %v1527
        %v1534 = vsub.f32 %v1509, %v1528
        %v1535 = vsub.f32 %v1510, %v1529
        %v1536 = vmul.f32 %v1530, %v1530
        %v1537 = vmul.f32 %v1531, %v1531
        %v1538 = vmul.f32 %v1532, %v1532
        %v1539 = vmul.f32 %v1533, %v1533
        %v1540 = vmul.f32 %v1534, %v1534
        %v1541 = vmul.f32 %v1535, %v1535
        %1542 = vadd.xlane.f32.xlu0 %v1536
        %v1543 = vpop.xlane.xlu0 %1542
        %1544 = vadd.xlane.f32.xlu0 %v1537
        %v1545 = vpop.xlane.xlu0 %1544
        %1546 = vadd.xlane.f32.xlu0 %v1538
        %v1547 = vpop.xlane.xlu0 %1546
        %1548 = vadd.xlane.f32.xlu0 %v1539
        %v1549 = vpop.xlane.xlu0 %1548
        %1550 = vadd.xlane.f32.xlu0 %v1540
        %v1551 = vpop.xlane.xlu0 %1550
        %1552 = vadd.xlane.f32.xlu0 %v1541
        %v1553 = vpop.xlane.xlu0 %1552
        %v1554 = vmul.f32 %v1543, %v1523
        %v1555 = vmul.f32 %v1545, %v1523
        %v1556 = vmul.f32 %v1547, %v1523
        %v1557 = vmul.f32 %v1549, %v1523
        %v1558 = vmul.f32 %v1551, %v1523
        %v1559 = vmul.f32 %v1553, %v1523
        %v1560 = vadd.f32 %v1554, 1e-05
        %v1561 = vadd.f32 %v1555, 1e-05
        %v1562 = vadd.f32 %v1556, 1e-05
        %v1563 = vadd.f32 %v1557, 1e-05
        %v1564 = vadd.f32 %v1558, 1e-05
        %v1565 = vadd.f32 %v1559, 1e-05
        %v1566 = vrsqrt.pop %v1560
        %v1567 = vrsqrt.pop %v1561
        %v1568 = vrsqrt.pop %v1562
        %v1569 = vrsqrt.pop %v1563
        %v1570 = vrsqrt.pop %v1564
        %v1571 = vrsqrt.pop %v1565
        %v1572 = vmul.f32 %v1530, %v1566
        %v1573 = vmul.f32 %v1531, %v1567
        %v1574 = vmul.f32 %v1532, %v1568
        %v1575 = vmul.f32 %v1533, %v1569
        %v1576 = vmul.f32 %v1534, %v1570
        %v1577 = vmul.f32 %v1535, %v1571
        %v1578 = vld [vmem:[%s358 + $0x2] ss:$0 sm:$0xff]
        %v1579 = vmul.f32 %v1572, %v1578
        %v1580 = vmul.f32 %v1573, %v1578
        %v1581 = vmul.f32 %v1574, %v1578
        %v1582 = vmul.f32 %v1575, %v1578
        %v1583 = vmul.f32 %v1576, %v1578
        %v1584 = vmul.f32 %v1577, %v1578
        %v1585 = vld [vmem:[%s358 + $0x3] ss:$0 sm:$0xff]
        %v1586 = vadd.f32 %v1579, %v1585
        %v1587 = vadd.f32 %v1580, %v1585
        %v1588 = vadd.f32 %v1581, %v1585
        %v1589 = vadd.f32 %v1582, %v1585
        %v1590 = vadd.f32 %v1583, %v1585
        %v1591 = vadd.f32 %v1584, %v1585
        %v1592 = vpack.c.bf16 %v1587, %v1586
        %v1593 = vpack.c.bf16 %v1589, %v1588
        %v1594 = vpack.c.bf16 %v1591, %v1590
        %s1595 = scalar_lea.vmem %s358, 4
        %v1596 = vld [vmem:[%s1595] ss:$8 sm:$0x3]
        %v1598 = vlaneseq
        %v1599 = vshrl.u32 %v1598, 7
        %v1600 = vsub.s32 0, %v1599
        %v1601 = vrot.slane %v1596, %v1600
        %v1602 = vlaneseq
        %v1603 = vshrl.u32 %v1602, 7
        %v1604 = vsub.s32 1, %v1603
        %v1605 = vrot.slane %v1596, %v1604
        %v1624 = vunpack.c.l.b16 %v587
        %v1625 = vunpack.c.h.b16 %v587
        %v1626 = vunpack.c.l.b16 %v588
        %v1627 = vunpack.c.h.b16 %v588
        %v1628 = vunpack.c.l.b16 %v589
        %v1629 = vunpack.c.h.b16 %v589
        %v1630 = vunpack.c.l.b16 %v590
        %v1631 = vunpack.c.h.b16 %v590
        %v1632 = vunpack.c.l.b16 %v591
        %v1633 = vunpack.c.h.b16 %v591
        %v1634 = vunpack.c.l.b16 %v592
        %v1635 = vunpack.c.h.b16 %v592
        %v1636 = vunpack.c.l.b16 %v593
        %v1637 = vunpack.c.h.b16 %v593
        %v1638 = vunpack.c.l.b16 %v594
        %v1639 = vunpack.c.h.b16 %v594
        %v1640 = vunpack.c.l.b16 %v595
        %v1641 = vunpack.c.h.b16 %v595
        %v1642 = vunpack.c.l.b16 %v596
        %v1643 = vunpack.c.h.b16 %v596
        %v1644 = vunpack.c.l.b16 %v597
        %v1645 = vunpack.c.h.b16 %v597
        %v1646 = vunpack.c.l.b16 %v598
        %v1647 = vunpack.c.h.b16 %v598
        %v1648 = vunpack.c.l.b16 %v599
        %v1649 = vunpack.c.h.b16 %v599
        %v1650 = vunpack.c.l.b16 %v600
        %v1651 = vunpack.c.h.b16 %v600
        %v1652 = vunpack.c.l.b16 %v601
        %v1653 = vunpack.c.h.b16 %v601
        %v1654 = vunpack.c.l.b16 %v602
        %v1655 = vunpack.c.h.b16 %v602
        %v1656 = vpack.c.b16 %v1626, %v1624
        %v1657 = vpack.c.b16 %v1627, %v1625
        %v1658 = vpack.c.b16 %v1630, %v1628
        %v1659 = vpack.c.b16 %v1631, %v1629
        %v1660 = vpack.c.b16 %v1634, %v1632
        %v1661 = vpack.c.b16 %v1635, %v1633
        %v1662 = vpack.c.b16 %v1638, %v1636
        %v1663 = vpack.c.b16 %v1639, %v1637
        %v1664 = vpack.c.b16 %v1642, %v1640
        %v1665 = vpack.c.b16 %v1643, %v1641
        %v1666 = vpack.c.b16 %v1646, %v1644
        %v1667 = vpack.c.b16 %v1647, %v1645
        %v1668 = vpack.c.b16 %v1650, %v1648
        %v1669 = vpack.c.b16 %v1651, %v1649
        %v1670 = vpack.c.b16 %v1654, %v1652
        %v1671 = vpack.c.b16 %v1655, %v1653
        %1688 = vmatprep.subr.bf16.mxu0 %v1671
        %1689 = vmatpush1.bf16.msra.mxu0 %v1670
        %1690 = vmatprep.subr.bf16.mxu0 %v1669
        %1691 = vmatpush1.bf16.msra.mxu0 %v1668
        %1692 = vmatprep.subr.bf16.mxu0 %v1667
        %1693 = vmatpush1.bf16.msra.mxu0 %v1666
        %1694 = vmatprep.subr.bf16.mxu0 %v1665
        %1695 = vmatpush1.bf16.msra.mxu0 %v1664
        %1696 = vmatprep.subr.bf16.mxu0 %v1663
        %1697 = vmatpush1.bf16.msra.mxu0 %v1662
        %1698 = vmatprep.subr.bf16.mxu0 %v1661
        %1699 = vmatpush1.bf16.msra.mxu0 %v1660
        %1700 = vmatprep.subr.bf16.mxu0 %v1659
        %1701 = vmatpush1.bf16.msra.mxu0 %v1658
        %1702 = vmatprep.subr.bf16.mxu0 %v1657
        %1703 = vmatpush1.bf16.msra.mxu0 %v1656
        %1704 = vmatprep.subr.bf16.mxu0 0
        %1705 = vmatpush2.bf16.msra.mxu0 0
        %1706 = vmatprep.subr.bf16.mxu0 0
        %1707 = vmatpush2.bf16.msra.mxu0 0
        %1708 = vmatprep.subr.bf16.mxu0 0
        %1709 = vmatpush2.bf16.msra.mxu0 0
        %1710 = vmatprep.subr.bf16.mxu0 0
        %1711 = vmatpush2.bf16.msra.mxu0 0
        %1712 = vmatprep.subr.bf16.mxu0 0
        %1713 = vmatpush2.bf16.msra.mxu0 0
        %1714 = vmatprep.subr.bf16.mxu0 0
        %1715 = vmatpush2.bf16.msra.mxu0 0
        %1716 = vmatprep.subr.bf16.mxu0 0
        %1717 = vmatpush2.bf16.msra.mxu0 0
        %1718 = vmatprep.subr.bf16.mxu0 0
        %1719 = vmatpush2.bf16.msra.mxu0 0
        %1720 = vmatprep.mubr.bf16.mxu0 0
        %1721 = vmatmul.mubr.bf16.gmra.mxu0 %v1592
        %v1722 = vpop.f32.mrf.mxu0
        %v1723 = vadd.f32 %v1601, %v1722
        %v1724 = vpop.f32.mrf.mxu0
        %v1725 = vadd.f32 %v1605, %v1724
        %v1726 = vpop.f32.mrf.mxu0
        %v1727 = vadd.f32 %v1601, %v1726
        %v1728 = vpop.f32.mrf.mxu0
        %v1729 = vadd.f32 %v1605, %v1728
        %1730 = vmatprep.mubr.bf16.mxu0 0
        %1731 = vmatmul.mubr.bf16.gmra.mxu0 %v1593
        %v1732 = vpop.f32.mrf.mxu0
        %v1733 = vadd.f32 %v1601, %v1732
        %v1734 = vpop.f32.mrf.mxu0
        %v1735 = vadd.f32 %v1605, %v1734
        %v1736 = vpop.f32.mrf.mxu0
        %v1737 = vadd.f32 %v1601, %v1736
        %v1738 = vpop.f32.mrf.mxu0
        %v1739 = vadd.f32 %v1605, %v1738
        %1740 = vmatprep.mubr.bf16.mxu0 0
        %1741 = vmatmul.mubr.bf16.gmra.mxu0 %v1594
        %v1742 = vpop.f32.mrf.mxu0
        %v1743 = vadd.f32 %v1601, %v1742
        %v1744 = vpop.f32.mrf.mxu0
        %v1745 = vadd.f32 %v1605, %v1744
        %v1746 = vpop.f32.mrf.mxu0
        %v1747 = vadd.f32 %v1601, %v1746
        %v1748 = vpop.f32.mrf.mxu0
        %v1749 = vadd.f32 %v1605, %v1748
        %1750 = vdwg.mxu0
        %v1751 = vmax.f32 %v1723, 0.0
        %v1752 = vmax.f32 %v1725, 0.0
        %v1753 = vmax.f32 %v1727, 0.0
        %v1754 = vmax.f32 %v1729, 0.0
        %v1755 = vmax.f32 %v1733, 0.0
        %v1756 = vmax.f32 %v1735, 0.0
        %v1757 = vmax.f32 %v1737, 0.0
        %v1758 = vmax.f32 %v1739, 0.0
        %v1759 = vmax.f32 %v1743, 0.0
        %v1760 = vmax.f32 %v1745, 0.0
        %v1761 = vmax.f32 %v1747, 0.0
        %v1762 = vmax.f32 %v1749, 0.0
        %v1763 = vpack.c.bf16 %v1753, %v1751
        %v1764 = vpack.c.bf16 %v1754, %v1752
        %v1765 = vpack.c.bf16 %v1757, %v1755
        %v1766 = vpack.c.bf16 %v1758, %v1756
        %v1767 = vpack.c.bf16 %v1761, %v1759
        %v1768 = vpack.c.bf16 %v1762, %v1760
        %v1769 = vld [vmem:[%s358 + $0x5] ss:$0 sm:$0xff]
        %v1802 = vunpack.c.l.b16 %v619
        %v1803 = vunpack.c.l.b16 %v620
        %v1804 = vunpack.c.l.b16 %v621
        %v1805 = vunpack.c.l.b16 %v622
        %v1806 = vunpack.c.l.b16 %v623
        %v1807 = vunpack.c.l.b16 %v624
        %v1808 = vunpack.c.l.b16 %v625
        %v1809 = vunpack.c.l.b16 %v626
        %v1810 = vunpack.c.l.b16 %v627
        %v1811 = vunpack.c.l.b16 %v628
        %v1812 = vunpack.c.l.b16 %v629
        %v1813 = vunpack.c.l.b16 %v630
        %v1814 = vunpack.c.l.b16 %v631
        %v1815 = vunpack.c.l.b16 %v632
        %v1816 = vunpack.c.l.b16 %v633
        %v1817 = vunpack.c.l.b16 %v634
        %v1818 = vunpack.c.l.b16 %v635
        %v1819 = vunpack.c.l.b16 %v636
        %v1820 = vunpack.c.l.b16 %v637
        %v1821 = vunpack.c.l.b16 %v638
        %v1822 = vunpack.c.l.b16 %v639
        %v1823 = vunpack.c.l.b16 %v640
        %v1824 = vunpack.c.l.b16 %v641
        %v1825 = vunpack.c.l.b16 %v642
        %v1826 = vunpack.c.l.b16 %v643
        %v1827 = vunpack.c.l.b16 %v644
        %v1828 = vunpack.c.l.b16 %v645
        %v1829 = vunpack.c.l.b16 %v646
        %v1830 = vunpack.c.l.b16 %v647
        %v1831 = vunpack.c.l.b16 %v648
        %v1832 = vunpack.c.l.b16 %v649
        %v1833 = vunpack.c.l.b16 %v650
        %v1834 = vpack.c.b16 %v1803, %v1802
        %v1835 = vpack.c.b16 %v1805, %v1804
        %v1836 = vpack.c.b16 %v1807, %v1806
        %v1837 = vpack.c.b16 %v1809, %v1808
        %v1838 = vpack.c.b16 %v1811, %v1810
        %v1839 = vpack.c.b16 %v1813, %v1812
        %v1840 = vpack.c.b16 %v1815, %v1814
        %v1841 = vpack.c.b16 %v1817, %v1816
        %v1842 = vpack.c.b16 %v1819, %v1818
        %v1843 = vpack.c.b16 %v1821, %v1820
        %v1844 = vpack.c.b16 %v1823, %v1822
        %v1845 = vpack.c.b16 %v1825, %v1824
        %v1846 = vpack.c.b16 %v1827, %v1826
        %v1847 = vpack.c.b16 %v1829, %v1828
        %v1848 = vpack.c.b16 %v1831, %v1830
        %v1849 = vpack.c.b16 %v1833, %v1832
        %1866 = vmatprep.subr.bf16.mxu0 0
        %1867 = vmatpush1.bf16.msra.mxu0 %v1841
        %1868 = vmatprep.subr.bf16.mxu0 0
        %1869 = vmatpush1.bf16.msra.mxu0 %v1840
        %1870 = vmatprep.subr.bf16.mxu0 0
        %1871 = vmatpush1.bf16.msra.mxu0 %v1839
        %1872 = vmatprep.subr.bf16.mxu0 0
        %1873 = vmatpush1.bf16.msra.mxu0 %v1838
        %1874 = vmatprep.subr.bf16.mxu0 0
        %1875 = vmatpush1.bf16.msra.mxu0 %v1837
        %1876 = vmatprep.subr.bf16.mxu0 0
        %1877 = vmatpush1.bf16.msra.mxu0 %v1836
        %1878 = vmatprep.subr.bf16.mxu0 0
        %1879 = vmatpush1.bf16.msra.mxu0 %v1835
        %1880 = vmatprep.subr.bf16.mxu0 0
        %1881 = vmatpush1.bf16.msra.mxu0 %v1834
        %1882 = vmatprep.subr.bf16.mxu0 0
        %1883 = vmatpush2.bf16.msra.mxu0 %v1849
        %1884 = vmatprep.subr.bf16.mxu0 0
        %1885 = vmatpush2.bf16.msra.mxu0 %v1848
        %1886 = vmatprep.subr.bf16.mxu0 0
        %1887 = vmatpush2.bf16.msra.mxu0 %v1847
        %1888 = vmatprep.subr.bf16.mxu0 0
        %1889 = vmatpush2.bf16.msra.mxu0 %v1846
        %1890 = vmatprep.subr.bf16.mxu0 0
        %1891 = vmatpush2.bf16.msra.mxu0 %v1845
        %1892 = vmatprep.subr.bf16.mxu0 0
        %1893 = vmatpush2.bf16.msra.mxu0 %v1844
        %1894 = vmatprep.subr.bf16.mxu0 0
        %1895 = vmatpush2.bf16.msra.mxu0 %v1843
        %1896 = vmatprep.subr.bf16.mxu0 0
        %1897 = vmatpush2.bf16.msra.mxu0 %v1842
        %1898 = vmatprep.mubr.bf16.mxu0 %v1764
        %1899 = vmatmul.mubr.bf16.gmra.mxu0 %v1763
        %v1900 = vpop.f32.mrf.mxu0
        %v1901 = vadd.f32 %v1769, %v1900
        %v1902 = vpop.f32.mrf.mxu0
        %v1903 = vpop.f32.mrf.mxu0
        %v1904 = vadd.f32 %v1769, %v1903
        %v1905 = vpop.f32.mrf.mxu0
        %1906 = vmatprep.mubr.bf16.mxu0 %v1766
        %1907 = vmatmul.mubr.bf16.gmra.mxu0 %v1765
        %v1908 = vpop.f32.mrf.mxu0
        %v1909 = vadd.f32 %v1769, %v1908
        %v1910 = vpop.f32.mrf.mxu0
        %v1911 = vpop.f32.mrf.mxu0
        %v1912 = vadd.f32 %v1769, %v1911
        %v1913 = vpop.f32.mrf.mxu0
        %1914 = vmatprep.mubr.bf16.mxu0 %v1768
        %1915 = vmatmul.mubr.bf16.gmra.mxu0 %v1767
        %v1916 = vpop.f32.mrf.mxu0
        %v1917 = vadd.f32 %v1769, %v1916
        %v1918 = vpop.f32.mrf.mxu0
        %v1919 = vpop.f32.mrf.mxu0
        %v1920 = vadd.f32 %v1769, %v1919
        %v1921 = vpop.f32.mrf.mxu0
        %1922 = vdwg.mxu0
        %v1923 = vadd.f32 %v1586, %v1901
        %v1924 = vadd.f32 %v1587, %v1904
        %v1925 = vadd.f32 %v1588, %v1909
        %v1926 = vadd.f32 %v1589, %v1912
        %v1927 = vadd.f32 %v1590, %v1917
        %v1928 = vadd.f32 %v1591, %v1920
        %1929 = vadd.xlane.f32.xlu0 %v1923
        %v1930 = vpop.xlane.xlu0 %1929
        %1931 = vadd.xlane.f32.xlu0 %v1924
        %v1932 = vpop.xlane.xlu0 %1931
        %1933 = vadd.xlane.f32.xlu0 %v1925
        %v1934 = vpop.xlane.xlu0 %1933
        %1935 = vadd.xlane.f32.xlu0 %v1926
        %v1936 = vpop.xlane.xlu0 %1935
        %1937 = vadd.xlane.f32.xlu0 %v1927
        %v1938 = vpop.xlane.xlu0 %1937
        %1939 = vadd.xlane.f32.xlu0 %v1928
        %v1940 = vpop.xlane.xlu0 %1939
        %v1941 = vmul.f32 %v1930, %v1523
        %v1942 = vmul.f32 %v1932, %v1523
        %v1943 = vmul.f32 %v1934, %v1523
        %v1944 = vmul.f32 %v1936, %v1523
        %v1945 = vmul.f32 %v1938, %v1523
        %v1946 = vmul.f32 %v1940, %v1523
        %v1947 = vsub.f32 %v1923, %v1941
        %v1948 = vsub.f32 %v1924, %v1942
        %v1949 = vsub.f32 %v1925, %v1943
        %v1950 = vsub.f32 %v1926, %v1944
        %v1951 = vsub.f32 %v1927, %v1945
        %v1952 = vsub.f32 %v1928, %v1946
        %v1953 = vmul.f32 %v1947, %v1947
        %v1954 = vmul.f32 %v1948, %v1948
        %v1955 = vmul.f32 %v1949, %v1949
        %v1956 = vmul.f32 %v1950, %v1950
        %v1957 = vmul.f32 %v1951, %v1951
        %v1958 = vmul.f32 %v1952, %v1952
        %1959 = vadd.xlane.f32.xlu0 %v1953
        %v1960 = vpop.xlane.xlu0 %1959
        %1961 = vadd.xlane.f32.xlu0 %v1954
        %v1962 = vpop.xlane.xlu0 %1961
        %1963 = vadd.xlane.f32.xlu0 %v1955
        %v1964 = vpop.xlane.xlu0 %1963
        %1965 = vadd.xlane.f32.xlu0 %v1956
        %v1966 = vpop.xlane.xlu0 %1965
        %1967 = vadd.xlane.f32.xlu0 %v1957
        %v1968 = vpop.xlane.xlu0 %1967
        %1969 = vadd.xlane.f32.xlu0 %v1958
        %v1970 = vpop.xlane.xlu0 %1969
        %v1971 = vmul.f32 %v1960, %v1523
        %v1972 = vmul.f32 %v1962, %v1523
        %v1973 = vmul.f32 %v1964, %v1523
        %v1974 = vmul.f32 %v1966, %v1523
        %v1975 = vmul.f32 %v1968, %v1523
        %v1976 = vmul.f32 %v1970, %v1523
        %v1977 = vadd.f32 %v1971, 1e-05
        %v1978 = vadd.f32 %v1972, 1e-05
        %v1979 = vadd.f32 %v1973, 1e-05
        %v1980 = vadd.f32 %v1974, 1e-05
        %v1981 = vadd.f32 %v1975, 1e-05
        %v1982 = vadd.f32 %v1976, 1e-05
        %v1983 = vrsqrt.pop %v1977
        %v1984 = vrsqrt.pop %v1978
        %v1985 = vrsqrt.pop %v1979
        %v1986 = vrsqrt.pop %v1980
        %v1987 = vrsqrt.pop %v1981
        %v1988 = vrsqrt.pop %v1982
        %v1989 = vmul.f32 %v1947, %v1983
        %v1990 = vmul.f32 %v1948, %v1984
        %v1991 = vmul.f32 %v1949, %v1985
        %v1992 = vmul.f32 %v1950, %v1986
        %v1993 = vmul.f32 %v1951, %v1987
        %v1994 = vmul.f32 %v1952, %v1988
        %v1995 = vld [vmem:[%s358 + $0x6] ss:$0 sm:$0xff]
        %v1996 = vmul.f32 %v1989, %v1995
        %v1997 = vmul.f32 %v1990, %v1995
        %v1998 = vmul.f32 %v1991, %v1995
        %v1999 = vmul.f32 %v1992, %v1995
        %v2000 = vmul.f32 %v1993, %v1995
        %v2001 = vmul.f32 %v1994, %v1995
        %v2002 = vld [vmem:[%s358 + $0x7] ss:$0 sm:$0xff]
        %v2003 = vadd.f32 %v1996, %v2002
        %v2004 = vadd.f32 %v1997, %v2002
        %v2005 = vadd.f32 %v1998, %v2002
        %v2006 = vadd.f32 %v1999, %v2002
        %v2007 = vadd.f32 %v2000, %v2002
        %v2008 = vadd.f32 %v2001, %v2002
        %2009 = vst [vmem:[#allocation2] sm:$0xff] %v2003
        %2010 = vst [vmem:[#allocation2 + $0x8] sm:$0xff] %v2004
        %2011 = vst [vmem:[#allocation2 + $0x10] sm:$0xff] %v2005
        %2012 = vst [vmem:[#allocation2 + $0x18] sm:$0xff] %v2006
        %2013 = vst [vmem:[#allocation2 + $0x20] sm:$0xff] %v2007
        %2014 = vst [vmem:[#allocation2 + $0x28] sm:$0xff] %v2008
        %v2015 = vmul.u32 %v652, 24
        %v2016 = vadd.s32 %v2015, 16
        %vm2017 = vcmp.eq.s32.totalorder %v669, %v2016
        %v2018 = vsel %vm2017, 1.0, 0.0
        %vm2019 = vcmask 392192
        %v2021 = vsel %vm2019, %v2018, 0
        %2023 = vmatprep.subr.mxu0 0.0
        %2024 = vmatpush1.msra.mxu0 0.0
        %2025 = vmatprep.subr.mxu0 0.0
        %2026 = vmatpush1.msra.mxu0 0.0
        %2027 = vmatprep.subr.mxu0 0.0
        %2028 = vmatpush1.msra.mxu0 0.0
        %2029 = vmatprep.subr.mxu0 0.0
        %2030 = vmatpush1.msra.mxu0 0.0
        %2031 = vmatprep.subr.mxu0 0.0
        %2032 = vmatpush1.msra.mxu0 0.0
        %2033 = vmatprep.subr.mxu0 0.0
        %2034 = vmatpush1.msra.mxu0 0.0
        %2035 = vmatprep.subr.mxu0 0.0
        %2036 = vmatpush1.msra.mxu0 0.0
        %2037 = vmatprep.subr.mxu0 0.0
        %2038 = vmatpush1.msra.mxu0 0.0
        %2039 = vmatprep.subr.mxu0 0.0
        %2040 = vmatpush1.msra.mxu0 0.0
        %2041 = vmatprep.subr.mxu0 0.0
        %2042 = vmatpush1.msra.mxu0 0.0
        %2043 = vmatprep.subr.mxu0 0.0
        %2044 = vmatpush1.msra.mxu0 %v2008
        %2045 = vmatprep.subr.mxu0 0.0
        %2046 = vmatpush1.msra.mxu0 %v2007
        %2047 = vmatprep.subr.mxu0 0.0
        %2048 = vmatpush1.msra.mxu0 %v2006
        %2049 = vmatprep.subr.mxu0 0.0
        %2050 = vmatpush1.msra.mxu0 %v2005
        %2051 = vmatprep.subr.mxu0 0.0
        %2052 = vmatpush1.msra.mxu0 %v2004
        %2053 = vmatprep.subr.mxu0 0.0
        %2054 = vmatpush1.msra.mxu0 %v2003
        %2055 = vmatprep.subr.mxu0 0.0
        %2056 = vmatpush2.msra.mxu0 0.0
        %2057 = vmatprep.subr.mxu0 0.0
        %2058 = vmatpush2.msra.mxu0 0.0
        %2059 = vmatprep.subr.mxu0 0.0
        %2060 = vmatpush2.msra.mxu0 0.0
        %2061 = vmatprep.subr.mxu0 0.0
        %2062 = vmatpush2.msra.mxu0 0.0
        %2063 = vmatprep.subr.mxu0 0.0
        %2064 = vmatpush2.msra.mxu0 0.0
        %2065 = vmatprep.subr.mxu0 0.0
        %2066 = vmatpush2.msra.mxu0 0.0
        %2067 = vmatprep.subr.mxu0 0.0
        %2068 = vmatpush2.msra.mxu0 0.0
        %2069 = vmatprep.subr.mxu0 0.0
        %2070 = vmatpush2.msra.mxu0 0.0
        %2071 = vmatprep.subr.mxu0 0.0
        %2072 = vmatpush2.msra.mxu0 0.0
        %2073 = vmatprep.subr.mxu0 0.0
        %2074 = vmatpush2.msra.mxu0 0.0
        %2075 = vmatprep.subr.mxu0 0.0
        %2076 = vmatpush2.msra.mxu0 0.0
        %2077 = vmatprep.subr.mxu0 0.0
        %2078 = vmatpush2.msra.mxu0 0.0
        %2079 = vmatprep.subr.mxu0 0.0
        %2080 = vmatpush2.msra.mxu0 0.0
        %2081 = vmatprep.subr.mxu0 0.0
        %2082 = vmatpush2.msra.mxu0 0.0
        %2083 = vmatprep.subr.mxu0 0.0
        %2084 = vmatpush2.msra.mxu0 0.0
        %2085 = vmatprep.subr.mxu0 0.0
        %2086 = vmatpush2.msra.mxu0 0.0
        %2087 = vmatprep.mubr.f32.mxu0 0.0
        %2088 = vmatmul.mubr.f32.gmra.mxu0 %v2021
        %v2089 = vpop.f32.mrf.mxu0
        %v2090 = vadd.f32 0.0, %v2089
        %v2091 = vpop.f32.mrf.mxu0
        %2092 = vdwg.mxu0
        %v2093 = vpack.c.bf16 %v2090, %v2090
        %v2094 = vld [vmem:[%s6] sm:$0xff]
        %v2095 = vld [vmem:[%s6 + $0x8] sm:$0xff]
        %v2096 = vld [vmem:[%s6 + $0x10] sm:$0xff]
        %v2097 = vld [vmem:[%s6 + $0x18] sm:$0xff]
        %v2098 = vld [vmem:[%s6 + $0x20] sm:$0xff]
        %v2099 = vld [vmem:[%s6 + $0x28] sm:$0xff]
        %v2100 = vld [vmem:[%s6 + $0x30] sm:$0xff]
        %v2101 = vld [vmem:[%s6 + $0x38] sm:$0xff]
        %v2102 = vld [vmem:[%s6 + $0x40] sm:$0xff]
        %v2103 = vld [vmem:[%s6 + $0x48] sm:$0xff]
        %v2104 = vld [vmem:[%s6 + $0x50] sm:$0xff]
        %v2105 = vld [vmem:[%s6 + $0x58] sm:$0xff]
        %v2106 = vld [vmem:[%s6 + $0x60] sm:$0xff]
        %v2107 = vld [vmem:[%s6 + $0x68] sm:$0xff]
        %v2108 = vld [vmem:[%s6 + $0x70] sm:$0xff]
        %v2109 = vld [vmem:[%s6 + $0x78] sm:$0xff]
        %v2110 = vld [vmem:[%s8] ss:$2 sm:$0x3]
        %v2112 = vlaneseq
        %v2113 = vshrl.u32 %v2112, 7
        %v2114 = vsub.s32 0, %v2113
        %v2115 = vrot.slane %v2110, %v2114
        %v2116 = vlaneseq
        %v2117 = vshrl.u32 %v2116, 7
        %v2118 = vsub.s32 1, %v2117
        %v2119 = vrot.slane %v2110, %v2118
        %v2138 = vunpack.c.l.b16 %v2094
        %v2139 = vunpack.c.h.b16 %v2094
        %v2140 = vunpack.c.l.b16 %v2095
        %v2141 = vunpack.c.h.b16 %v2095
        %v2142 = vunpack.c.l.b16 %v2096
        %v2143 = vunpack.c.h.b16 %v2096
        %v2144 = vunpack.c.l.b16 %v2097
        %v2145 = vunpack.c.h.b16 %v2097
        %v2146 = vunpack.c.l.b16 %v2098
        %v2147 = vunpack.c.h.b16 %v2098
        %v2148 = vunpack.c.l.b16 %v2099
        %v2149 = vunpack.c.h.b16 %v2099
        %v2150 = vunpack.c.l.b16 %v2100
        %v2151 = vunpack.c.h.b16 %v2100
        %v2152 = vunpack.c.l.b16 %v2101
        %v2153 = vunpack.c.h.b16 %v2101
        %v2154 = vunpack.c.l.b16 %v2102
        %v2155 = vunpack.c.h.b16 %v2102
        %v2156 = vunpack.c.l.b16 %v2103
        %v2157 = vunpack.c.h.b16 %v2103
        %v2158 = vunpack.c.l.b16 %v2104
        %v2159 = vunpack.c.h.b16 %v2104
        %v2160 = vunpack.c.l.b16 %v2105
        %v2161 = vunpack.c.h.b16 %v2105
        %v2162 = vunpack.c.l.b16 %v2106
        %v2163 = vunpack.c.h.b16 %v2106
        %v2164 = vunpack.c.l.b16 %v2107
        %v2165 = vunpack.c.h.b16 %v2107
        %v2166 = vunpack.c.l.b16 %v2108
        %v2167 = vunpack.c.h.b16 %v2108
        %v2168 = vunpack.c.l.b16 %v2109
        %v2169 = vunpack.c.h.b16 %v2109
        %v2170 = vpack.c.b16 %v2140, %v2138
        %v2171 = vpack.c.b16 %v2141, %v2139
        %v2172 = vpack.c.b16 %v2144, %v2142
        %v2173 = vpack.c.b16 %v2145, %v2143
        %v2174 = vpack.c.b16 %v2148, %v2146
        %v2175 = vpack.c.b16 %v2149, %v2147
        %v2176 = vpack.c.b16 %v2152, %v2150
        %v2177 = vpack.c.b16 %v2153, %v2151
        %v2178 = vpack.c.b16 %v2156, %v2154
        %v2179 = vpack.c.b16 %v2157, %v2155
        %v2180 = vpack.c.b16 %v2160, %v2158
        %v2181 = vpack.c.b16 %v2161, %v2159
        %v2182 = vpack.c.b16 %v2164, %v2162
        %v2183 = vpack.c.b16 %v2165, %v2163
        %v2184 = vpack.c.b16 %v2168, %v2166
        %v2185 = vpack.c.b16 %v2169, %v2167
        %2202 = vmatprep.subr.bf16.mxu0 %v2185
        %2203 = vmatpush1.bf16.msra.mxu0 %v2184
        %2204 = vmatprep.subr.bf16.mxu0 %v2183
        %2205 = vmatpush1.bf16.msra.mxu0 %v2182
        %2206 = vmatprep.subr.bf16.mxu0 %v2181
        %2207 = vmatpush1.bf16.msra.mxu0 %v2180
        %2208 = vmatprep.subr.bf16.mxu0 %v2179
        %2209 = vmatpush1.bf16.msra.mxu0 %v2178
        %2210 = vmatprep.subr.bf16.mxu0 %v2177
        %2211 = vmatpush1.bf16.msra.mxu0 %v2176
        %2212 = vmatprep.subr.bf16.mxu0 %v2175
        %2213 = vmatpush1.bf16.msra.mxu0 %v2174
        %2214 = vmatprep.subr.bf16.mxu0 %v2173
        %2215 = vmatpush1.bf16.msra.mxu0 %v2172
        %2216 = vmatprep.subr.bf16.mxu0 %v2171
        %2217 = vmatpush1.bf16.msra.mxu0 %v2170
        %2218 = vmatprep.subr.bf16.mxu0 0
        %2219 = vmatpush2.bf16.msra.mxu0 0
        %2220 = vmatprep.subr.bf16.mxu0 0
        %2221 = vmatpush2.bf16.msra.mxu0 0
        %2222 = vmatprep.subr.bf16.mxu0 0
        %2223 = vmatpush2.bf16.msra.mxu0 0
        %2224 = vmatprep.subr.bf16.mxu0 0
        %2225 = vmatpush2.bf16.msra.mxu0 0
        %2226 = vmatprep.subr.bf16.mxu0 0
        %2227 = vmatpush2.bf16.msra.mxu0 0
        %2228 = vmatprep.subr.bf16.mxu0 0
        %2229 = vmatpush2.bf16.msra.mxu0 0
        %2230 = vmatprep.subr.bf16.mxu0 0
        %2231 = vmatpush2.bf16.msra.mxu0 0
        %2232 = vmatprep.subr.bf16.mxu0 0
        %2233 = vmatpush2.bf16.msra.mxu0 0
        %2234 = vmatprep.mubr.bf16.mxu0 0
        %2235 = vmatmul.mubr.bf16.gmra.mxu0 %v2093
        %v2236 = vpop.f32.mrf.mxu0
        %v2237 = vadd.f32 %v2115, %v2236
        %v2238 = vpop.f32.mrf.mxu0
        %v2239 = vadd.f32 %v2119, %v2238
        %v2240 = vpop.f32.mrf.mxu0
        %v2241 = vpop.f32.mrf.mxu0
        %2242 = vdwg.mxu0
        %v2243 = vmul.f32 %v2237, 0.5
        %v2244 = vmul.f32 %v2239, 0.5
        %v2245 = vmul.f32 %v2237, 0.70710677
        %v2246 = vmul.f32 %v2239, 0.70710677
        %v2247 = vand.u32 2147483647, %v2245
        %v2248 = vand.u32 2147483647, %v2246
        %v2249 = vmul.f32 %v2247, 0.3275911
        %v2250 = vmul.f32 %v2248, 0.3275911
        %v2251 = vadd.f32 %v2249, 1.0
        %v2252 = vadd.f32 %v2250, 1.0
        %v2253 = vrcp.pop %v2251
        %v2254 = vmul.f32 1.0, %v2253
        %v2255 = vrcp.pop %v2252
        %v2256 = vmul.f32 1.0, %v2255
        %v2257 = vmul.f32 %v2254, 1.0614054
        %v2258 = vmul.f32 %v2256, 1.0614054
        %v2259 = vadd.f32 %v2257, -1.4531521
        %v2260 = vadd.f32 %v2258, -1.4531521
        %v2261 = vmul.f32 %v2259, %v2254
        %v2262 = vmul.f32 %v2260, %v2256
        %v2263 = vadd.f32 %v2261, 1.4214138
        %v2264 = vadd.f32 %v2262, 1.4214138
        %v2265 = vmul.f32 %v2263, %v2254
        %v2266 = vmul.f32 %v2264, %v2256
        %v2267 = vadd.f32 %v2265, -0.28449672
        %v2268 = vadd.f32 %v2266, -0.28449672
        %v2269 = vmul.f32 %v2267, %v2254
        %v2270 = vmul.f32 %v2268, %v2256
        %v2271 = vadd.f32 %v2269, 0.2548296
        %v2272 = vadd.f32 %v2270, 0.2548296
        %v2273 = vmul.f32 %v2271, %v2254
        %v2274 = vmul.f32 %v2272, %v2256
        %v2275 = vsub.f32 0.0, %v2247
        %v2276 = vsub.f32 0.0, %v2248
        %v2277 = vmul.f32 %v2275, %v2247
        %v2278 = vmul.f32 %v2276, %v2248
        %v2279 = vmul.f32 %v2277, 1.442695
        %v2280 = vpow.pop %v2279
        %v2281 = vmul.f32 %v2278, 1.442695
        %v2282 = vpow.pop %v2281
        %v2283 = vmul.f32 %v2273, %v2280
        %v2284 = vmul.f32 %v2274, %v2282
        %v2285 = vsub.f32 1.0, %v2283
        %v2286 = vsub.f32 1.0, %v2284
        %vm2287 = vcmp.ge.f32.partialorder %v2245, 0.0
        %vm2288 = vcmp.ge.f32.partialorder %v2246, 0.0
        %v2289 = vsub.f32 0.0, %v2285
        %v2290 = vsub.f32 0.0, %v2286
        %v2291 = vsel %vm2287, %v2285, %v2289
        %v2292 = vsel %vm2288, %v2286, %v2290
        %v2293 = vadd.f32 %v2291, 1.0
        %v2294 = vadd.f32 %v2292, 1.0
        %v2295 = vmul.f32 %v2243, %v2293
        %v2296 = vmul.f32 %v2244, %v2294
        %v2297 = vpack.c.bf16 %v2295, %v2295
        %v2298 = vpack.c.bf16 %v2296, %v2296
        %v2299 = vld [vmem:[%s7] sm:$0xf]
        %v2300 = vld [vmem:[%s7 + $0x4] sm:$0xf]
        %v2301 = vld [vmem:[%s7 + $0x8] sm:$0xf]
        %v2302 = vld [vmem:[%s7 + $0xc] sm:$0xf]
        %v2303 = vld [vmem:[%s7 + $0x10] sm:$0xf]
        %v2304 = vld [vmem:[%s7 + $0x14] sm:$0xf]
        %v2305 = vld [vmem:[%s7 + $0x18] sm:$0xf]
        %v2306 = vld [vmem:[%s7 + $0x1c] sm:$0xf]
        %v2307 = vld [vmem:[%s7 + $0x20] sm:$0xf]
        %v2308 = vld [vmem:[%s7 + $0x24] sm:$0xf]
        %v2309 = vld [vmem:[%s7 + $0x28] sm:$0xf]
        %v2310 = vld [vmem:[%s7 + $0x2c] sm:$0xf]
        %v2311 = vld [vmem:[%s7 + $0x30] sm:$0xf]
        %v2312 = vld [vmem:[%s7 + $0x34] sm:$0xf]
        %v2313 = vld [vmem:[%s7 + $0x38] sm:$0xf]
        %v2314 = vld [vmem:[%s7 + $0x3c] sm:$0xf]
        %v2315 = vld [vmem:[%s7 + $0x40] sm:$0xf]
        %v2316 = vld [vmem:[%s7 + $0x44] sm:$0xf]
        %v2317 = vld [vmem:[%s7 + $0x48] sm:$0xf]
        %v2318 = vld [vmem:[%s7 + $0x4c] sm:$0xf]
        %v2319 = vld [vmem:[%s7 + $0x50] sm:$0xf]
        %v2320 = vld [vmem:[%s7 + $0x54] sm:$0xf]
        %v2321 = vld [vmem:[%s7 + $0x58] sm:$0xf]
        %v2322 = vld [vmem:[%s7 + $0x5c] sm:$0xf]
        %v2323 = vld [vmem:[%s7 + $0x60] sm:$0xf]
        %v2324 = vld [vmem:[%s7 + $0x64] sm:$0xf]
        %v2325 = vld [vmem:[%s7 + $0x68] sm:$0xf]
        %v2326 = vld [vmem:[%s7 + $0x6c] sm:$0xf]
        %v2327 = vld [vmem:[%s7 + $0x70] sm:$0xf]
        %v2328 = vld [vmem:[%s7 + $0x74] sm:$0xf]
        %v2329 = vld [vmem:[%s7 + $0x78] sm:$0xf]
        %v2330 = vld [vmem:[%s7 + $0x7c] sm:$0xf]
        %v2331 = vld [vmem:[%s8 + $0x1] sm:$0x1]
        %v2332 = vlaneseq
        %v2333 = vshrl.u32 %v2332, 7
        %v2334 = vsub.s32 0, %v2333
        %v2335 = vrot.slane %v2331, %v2334
        %v2368 = vunpack.c.l.b16 %v2299
        %v2369 = vunpack.c.l.b16 %v2300
        %v2370 = vunpack.c.l.b16 %v2301
        %v2371 = vunpack.c.l.b16 %v2302
        %v2372 = vunpack.c.l.b16 %v2303
        %v2373 = vunpack.c.l.b16 %v2304
        %v2374 = vunpack.c.l.b16 %v2305
        %v2375 = vunpack.c.l.b16 %v2306
        %v2376 = vunpack.c.l.b16 %v2307
        %v2377 = vunpack.c.l.b16 %v2308
        %v2378 = vunpack.c.l.b16 %v2309
        %v2379 = vunpack.c.l.b16 %v2310
        %v2380 = vunpack.c.l.b16 %v2311
        %v2381 = vunpack.c.l.b16 %v2312
        %v2382 = vunpack.c.l.b16 %v2313
        %v2383 = vunpack.c.l.b16 %v2314
        %v2384 = vunpack.c.l.b16 %v2315
        %v2385 = vunpack.c.l.b16 %v2316
        %v2386 = vunpack.c.l.b16 %v2317
        %v2387 = vunpack.c.l.b16 %v2318
        %v2388 = vunpack.c.l.b16 %v2319
        %v2389 = vunpack.c.l.b16 %v2320
        %v2390 = vunpack.c.l.b16 %v2321
        %v2391 = vunpack.c.l.b16 %v2322
        %v2392 = vunpack.c.l.b16 %v2323
        %v2393 = vunpack.c.l.b16 %v2324
        %v2394 = vunpack.c.l.b16 %v2325
        %v2395 = vunpack.c.l.b16 %v2326
        %v2396 = vunpack.c.l.b16 %v2327
        %v2397 = vunpack.c.l.b16 %v2328
        %v2398 = vunpack.c.l.b16 %v2329
        %v2399 = vunpack.c.l.b16 %v2330
        %v2400 = vpack.c.b16 %v2369, %v2368
        %v2401 = vpack.c.b16 %v2371, %v2370
        %v2402 = vpack.c.b16 %v2373, %v2372
        %v2403 = vpack.c.b16 %v2375, %v2374
        %v2404 = vpack.c.b16 %v2377, %v2376
        %v2405 = vpack.c.b16 %v2379, %v2378
        %v2406 = vpack.c.b16 %v2381, %v2380
        %v2407 = vpack.c.b16 %v2383, %v2382
        %v2408 = vpack.c.b16 %v2385, %v2384
        %v2409 = vpack.c.b16 %v2387, %v2386
        %v2410 = vpack.c.b16 %v2389, %v2388
        %v2411 = vpack.c.b16 %v2391, %v2390
        %v2412 = vpack.c.b16 %v2393, %v2392
        %v2413 = vpack.c.b16 %v2395, %v2394
        %v2414 = vpack.c.b16 %v2397, %v2396
        %v2415 = vpack.c.b16 %v2399, %v2398
        %2432 = vmatprep.subr.bf16.mxu0 0
        %2433 = vmatpush1.bf16.msra.mxu0 %v2407
        %2434 = vmatprep.subr.bf16.mxu0 0
        %2435 = vmatpush1.bf16.msra.mxu0 %v2406
        %2436 = vmatprep.subr.bf16.mxu0 0
        %2437 = vmatpush1.bf16.msra.mxu0 %v2405
        %2438 = vmatprep.subr.bf16.mxu0 0
        %2439 = vmatpush1.bf16.msra.mxu0 %v2404
        %2440 = vmatprep.subr.bf16.mxu0 0
        %2441 = vmatpush1.bf16.msra.mxu0 %v2403
        %2442 = vmatprep.subr.bf16.mxu0 0
        %2443 = vmatpush1.bf16.msra.mxu0 %v2402
        %2444 = vmatprep.subr.bf16.mxu0 0
        %2445 = vmatpush1.bf16.msra.mxu0 %v2401
        %2446 = vmatprep.subr.bf16.mxu0 0
        %2447 = vmatpush1.bf16.msra.mxu0 %v2400
        %2448 = vmatprep.subr.bf16.mxu0 0
        %2449 = vmatpush2.bf16.msra.mxu0 %v2415
        %2450 = vmatprep.subr.bf16.mxu0 0
        %2451 = vmatpush2.bf16.msra.mxu0 %v2414
        %2452 = vmatprep.subr.bf16.mxu0 0
        %2453 = vmatpush2.bf16.msra.mxu0 %v2413
        %2454 = vmatprep.subr.bf16.mxu0 0
        %2455 = vmatpush2.bf16.msra.mxu0 %v2412
        %2456 = vmatprep.subr.bf16.mxu0 0
        %2457 = vmatpush2.bf16.msra.mxu0 %v2411
        %2458 = vmatprep.subr.bf16.mxu0 0
        %2459 = vmatpush2.bf16.msra.mxu0 %v2410
        %2460 = vmatprep.subr.bf16.mxu0 0
        %2461 = vmatpush2.bf16.msra.mxu0 %v2409
        %2462 = vmatprep.subr.bf16.mxu0 0
        %2463 = vmatpush2.bf16.msra.mxu0 %v2408
        %2464 = vmatprep.mubr.bf16.mxu0 %v2298
        %2465 = vmatmul.mubr.bf16.gmra.mxu0 %v2297
        %v2466 = vpop.f32.mrf.mxu0
        %v2467 = vadd.f32 %v2335, %v2466
        %v2468 = vpop.f32.mrf.mxu0
        %v2469 = vpop.f32.mrf.mxu0
        %v2470 = vpop.f32.mrf.mxu0
        %2471 = vdwg.mxu0
        %vm2472 = vcmask 74752
        %2473 = vst.msk [vmem:[#allocation3] sm:$0x3] %vm2472, %v2467
        // Predicated region
        $region61: #{vit_forward.1} parent=55 // pred_check
          %p2474 = pneg %p238
        $region62: #{vit_forward.1} parent=55 // pred_check_branch
          %2476 = sbr.rel (%p2474) target = $region64
        $region63: #{vit_forward.1} parent=55 // pred_region
          %s2478 = ssub.s32 32, 32
          %2479 = vsyncadd [#allocation4], %s2478
          %s2481 = sshll.u32 [#allocation3], 4
          %s2482 = int_to_ptr.vmem [resolvable:$true] %s2481
          %2484 = dma.vmem_to_hbm [thread:$0]  %s2482, 32, %s9, [#allocation4]
        $region64: #{vit_forward.1} parent=55 // pred_fallthru
          _
        // Predicated region
        $region65: #{vit_forward.1} parent=55 // pred_check
          %p2485 = pneg %p238
        $region66: #{vit_forward.1} parent=55 // pred_check_branch
          %2487 = sbr.rel (%p2485) target = $region68
        $region67: #{vit_forward.1} parent=55 // pred_region
          %2488 = dma.done [#allocation4], 32
        $region68: #{vit_forward.1} parent=55 // pred_fallthru
          _
      $region56: #{vit_forward.1} parent=5 // pred_fallthru
        _
      %p2489 = scmp.le.s32.totalorder 2, %s16
      // Predicated region
      $region69: #{vit_forward.1} parent=5 // pred_check
        %p2490 = pneg %p2489
      $region70: #{vit_forward.1} parent=5 // pred_check_branch
        %2492 = sbr.rel (%p2490) target = $region72
      $region71: #{vit_forward.1} parent=5 // pred_region
        %s2493 = ssub.s32 %s16, 2
      $region72: #{vit_forward.1} parent=5 // pred_fallthru
        _
    $region6: #{vit_forward.1} parent=1 // loop_footer
      %s20 = sadd.s32 1, %s16
    $region7: #{vit_forward.1} parent=1 // loop_footer_branch
      %15 = sbr.rel target = $region3
    $region8: #{vit_forward.1} parent=1 // loop_exit
      _
    %2494 = vsyncpa [#allocation4], 1
    %s2495 = scalar_lea.sflag [#allocation4], 1
    %2496 = vsyncpa %s2495, 1

</llo_original>
